<compile_context>
chip_gen: v7x
topology: tpu7x:2x2x1
jax: 0.10.0
libtpu: 0.0.40
codegen_flags: <defaults>
</compile_context>

<pallas_src>
import jax
import jax.numpy as jnp
from jax.experimental import pallas as pl
from jax.experimental.pallas import tpu as pltpu

K = 7          # conv kernel size
PAD = 3        # reflect padding


def _round_up(n, m):
    return ((n + m - 1) // m) * m


def _largest_divisor_leq(n, cap):
    cap = max(1, min(n, cap))
    best = 1
    for d in range(1, cap + 1):
        if n % d == 0:
            best = d
    return best


def _reflect_pad_plane(p, H, W, HP, WP):
    """Reflect-pad (pad=3) a (BB, H, W) f32 plane and zero-extend lanes to WP.

    Returns (BB, HP, WP) with HP = H + 2*PAD and WP a multiple of 128 (>= W+6).
    Matches jnp.pad(..., mode="reflect") / PyTorch padding_mode='reflect'.
    """
    bb = p.shape[0]
    top = [p[:, i:i + 1, :] for i in range(PAD, 0, -1)]                # rows 3,2,1
    bot = [p[:, i:i + 1, :] for i in range(H - 2, H - 2 - PAD, -1)]    # rows H-2,H-3,H-4
    ph = jnp.concatenate(top + [p] + bot, axis=1)                      # (BB, HP, W)
    left = [ph[:, :, j:j + 1] for j in range(PAD, 0, -1)]              # cols 3,2,1
    right = [ph[:, :, j:j + 1] for j in range(W - 2, W - 2 - PAD, -1)]  # cols W-2..W-4
    parts = left + [ph] + right
    extra = WP - (W + 2 * PAD)
    if extra > 0:
        parts.append(jnp.zeros((bb, HP, extra), jnp.float32))
    return jnp.concatenate(parts, axis=2)                              # (BB, HP, WP)


def _make_fused_kernel(H, W, HP, WP):
    def kernel(w_ref, b_ref, x_ref, o_ref, sum_ref, max_ref):
        # w_ref: SMEM (2*K*K,) flat weights [c, kh, kw]; channel 0 pre-scaled by 1/C
        # b_ref: SMEM (1,) bias
        # x_ref: VMEM (BB, CB, H, W) input block
        # o_ref: VMEM (BB, 1, H, W) output block (revisited across the C axis)
        # sum_ref/max_ref: VMEM (BB, H, W) running channel sum / max
        ci = pl.program_id(1)
        nc = pl.num_programs(1)

        x = x_ref[...].astype(jnp.float32)                    # (BB, CB, H, W)

        @pl.when(ci == 0)
        def _():
            sum_ref[...] = jnp.zeros(sum_ref.shape, sum_ref.dtype)
            max_ref[...] = jnp.full(max_ref.shape, -jnp.inf, max_ref.dtype)

        sum_ref[...] = sum_ref[...] + jnp.sum(x, axis=1)       # channel sum
        max_ref[...] = jnp.maximum(max_ref[...], jnp.max(x, axis=1))

        @pl.when(ci == nc - 1)
        def _():
            BB = o_ref.shape[0]
            acc = jnp.zeros((BB, H, WP), jnp.float32)
            # 2 input channels: (scaled) channel-sum plane, channel-max plane.
            for c in range(2):
                plane = sum_ref[...] if c == 0 else max_ref[...]
                xc = _reflect_pad_plane(plane, H, W, HP, WP)   # (BB, HP, WP)
                for kh in range(K):
                    band = xc[:, kh:kh + H, :]                 # (BB, H, WP)
                    for kw in range(K):
                        # Lane rotation instead of a misaligned slice; the
                        # wrapped lanes land at columns >= WP - 6 >= W and are
                        # discarded by the final [:, :, :W] slice.
                        sh = band if kw == 0 else pltpu.roll(
                            band, shift=WP - kw, axis=2)
                        wgt = w_ref[c * K * K + kh * K + kw]
                        acc = acc + wgt * sh
            out = acc[:, :, :W] + b_ref[0]                     # (BB, H, W)
            o_ref[...] = out[:, None, :, :].astype(o_ref.dtype)

    return kernel


def spatial_attention(x, weight, bias, *,
                      target_block_bytes=2 * 1024 * 1024,
                      max_batch_block=8):
    """x: [B, C, H, W]; weight: [1, 2, 7, 7]; bias: [1] -> [B, 1, H, W]."""
    B, C, H, W = x.shape
    assert H >= 4 and W >= 4, "reflect pad=3 requires spatial dims >= 4"
    HP = H + 2 * PAD
    WP = _round_up(W + 2 * PAD, 128)   # lane-align the padded/accumulator width

    # --- choose batch / channel blocking --------------------------------
    plane_bytes = H * W * 4
    # channel block: as many channels per step as fit the per-step byte budget
    CB = _largest_divisor_leq(C, max(1, target_block_bytes // plane_bytes))
    # batch block: fill the remaining budget, capped to bound vreg pressure in
    # the 98-tap loop; keep >= 2 batch grid steps when B >= 2 so both v7x
    # TensorCores receive work.
    bcap = max(1, target_block_bytes // (CB * plane_bytes))
    bcap = min(bcap, max_batch_block)
    if B >= 2:
        bcap = min(bcap, B // 2)
    BB = _largest_divisor_leq(B, bcap)
    grid = (B // BB, C // CB)          # reduction (channel) axis last

    # --- fold the 1/C mean scale into the channel-0 conv weights ---------
    w = weight.astype(jnp.float32).reshape(2, K, K)
    w = w.at[0].multiply(1.0 / C)
    w_flat = w.reshape(-1)                     # (2*K*K,) -> SMEM
    b_flat = bias.astype(jnp.float32).reshape(-1)

    kernel = _make_fused_kernel(H, W, HP, WP)
    return pl.pallas_call(
        kernel,
        out_shape=jax.ShapeDtypeStruct((B, 1, H, W), x.dtype),
        grid_spec=pltpu.PrefetchScalarGridSpec(
            num_scalar_prefetch=2,             # w_flat, bias -> SMEM
            grid=grid,
            in_specs=[pl.BlockSpec((BB, CB, H, W),
                                   lambda bi, ci, w_s, b_s: (bi, ci, 0, 0))],
            out_specs=pl.BlockSpec((BB, 1, H, W),
                                   lambda bi, ci, w_s, b_s: (bi, 0, 0, 0)),
            scratch_shapes=[pltpu.VMEM((BB, H, W), jnp.float32),   # running sum
                            pltpu.VMEM((BB, H, W), jnp.float32)],  # running max
        ),
        compiler_params=pltpu.CompilerParams(
            dimension_semantics=("parallel", "arbitrary"),
            vmem_limit_bytes=32 * 1024 * 1024,
        ),
    )(w_flat, b_flat, x)


# ---------------------------------------------------------------------------
# Pure-JAX reference for verification (matches the PyTorch module: no sigmoid)
# ---------------------------------------------------------------------------
def reference(x, weight, bias):
    x_avg = jnp.mean(x, axis=1, keepdims=True)
    x_max = jnp.max(x, axis=1, keepdims=True)
    x2 = jnp.concatenate([x_avg, x_max], axis=1)
    x2p = jnp.pad(x2, ((0, 0), (0, 0), (PAD, PAD), (PAD, PAD)), mode="reflect")
    out = jax.lax.conv_general_dilated(
        x2p, weight, window_strides=(1, 1), padding="VALID",
        dimension_numbers=("NCHW", "OIHW", "NCHW"))
    return out + bias.reshape(1, 1, 1, 1)


if __name__ == "__main__":
    key = jax.random.PRNGKey(0)
    kx, kw, kb = jax.random.split(key, 3)

    B, C, H, W = 2, 4, 16, 16
    x = jax.random.normal(kx, (B, C, H, W), dtype=jnp.float32)

    # Deterministic Conv2d(2, 1, 7) parameter init (kaiming-uniform-like bound).
    fan_in = 2 * K * K
    bound = 1.0 / (fan_in ** 0.5)
    weight = jax.random.uniform(kw, (1, 2, K, K), jnp.float32, -bound, bound)
    bias = jax.random.uniform(kb, (1,), jnp.float32, -bound, bound)

    out = spatial_attention(x, weight, bias)
    out = jax.block_until_ready(out)

    ref = reference(x, weight, bias)
    assert out.shape == (B, 1, H, W), out.shape
    assert jnp.allclose(out, ref, atol=1e-4, rtol=1e-4), (
        float(jnp.max(jnp.abs(out - ref))))

    print("KERNEL_OK")
</pallas_src>

<mosaic_0001>
module attributes {stable_mosaic.version = 11 : i64} {
  func.func @kernel(%arg0: i32, %arg1: i32, %arg2: memref<98xf32, #tpu.memory_space<smem>>, %arg3: memref<1xf32, #tpu.memory_space<smem>>, %arg4: memref<1x4x16x16xf32, #tpu.memory_space<vmem>>, %arg5: memref<1x1x16x16xf32, #tpu.memory_space<vmem>>, %arg6: memref<1x16x16xf32, #tpu.memory_space<vmem>>, %arg7: memref<1x16x16xf32, #tpu.memory_space<vmem>>) attributes {dimension_semantics = [#tpu.dimension_semantics<parallel>, #tpu.dimension_semantics<arbitrary>], iteration_bounds = array<i64: 2, 1>, scalar_prefetch = 2 : i64, scratch_operands = 2 : i64, tpu.core_type = #tpu.core_type<tc>, window_params = [{transform_indices = @transform_0, window_bounds = array<i64: 1, 4, 16, 16>}, {transform_indices = @transform_1, window_bounds = array<i64: 1, 1, 16, 16>}]} {
    %c0 = arith.constant 0 : index
    %c0_0 = arith.constant 0 : index
    %c0_1 = arith.constant 0 : index
    %c0_2 = arith.constant 0 : index
    %0 = vector.load %arg4[%c0, %c0_0, %c0_1, %c0_2] : memref<1x4x16x16xf32, #tpu.memory_space<vmem>>, vector<1x4x16x16xf32>
    %c0_i32 = arith.constant 0 : i32
    %1 = arith.cmpi eq, %arg1, %c0_i32 : i32
    %2 = arith.extui %1 : i1 to i32
    %c0_i32_3 = arith.constant 0 : i32
    %3 = arith.cmpi ne, %2, %c0_i32_3 : i32
    scf.if %3 {
      %cst_19 = arith.constant 0.000000e+00 : f32
      %15 = vector.broadcast %cst_19 : f32 to vector<1x16x16xf32>
      %c0_20 = arith.constant 0 : index
      %c0_21 = arith.constant 0 : index
      %c0_22 = arith.constant 0 : index
      %16 = vector.load %arg6[%c0_20, %c0_21, %c0_22] : memref<1x16x16xf32, #tpu.memory_space<vmem>>, vector<1x16x16xf32>
      tpu.vector_store %arg6[%c0_20, %c0_21, %c0_22], %15 {strides = array<i32>} : memref<1x16x16xf32, #tpu.memory_space<vmem>>, vector<1x16x16xf32>,
      %cst_23 = arith.constant 0xFF800000 : f32
      %17 = vector.broadcast %cst_23 : f32 to vector<1x16x16xf32>
      %c0_24 = arith.constant 0 : index
      %c0_25 = arith.constant 0 : index
      %c0_26 = arith.constant 0 : index
      %18 = vector.load %arg7[%c0_24, %c0_25, %c0_26] : memref<1x16x16xf32, #tpu.memory_space<vmem>>, vector<1x16x16xf32>
      tpu.vector_store %arg7[%c0_24, %c0_25, %c0_26], %17 {strides = array<i32>} : memref<1x16x16xf32, #tpu.memory_space<vmem>>, vector<1x16x16xf32>,
    } else {
    }
    %c0_4 = arith.constant 0 : index
    %c0_5 = arith.constant 0 : index
    %c0_6 = arith.constant 0 : index
    %4 = vector.load %arg6[%c0_4, %c0_5, %c0_6] : memref<1x16x16xf32, #tpu.memory_space<vmem>>, vector<1x16x16xf32>
    %cst = arith.constant dense<0.000000e+00> : vector<1x16x16xf32>
    %5 = vector.multi_reduction <add>, %0, %cst [1] : vector<1x4x16x16xf32> to vector<1x16x16xf32>
    %6 = arith.addf %4, %5 : vector<1x16x16xf32>
    %c0_7 = arith.constant 0 : index
    %c0_8 = arith.constant 0 : index
    %c0_9 = arith.constant 0 : index
    %7 = vector.load %arg6[%c0_7, %c0_8, %c0_9] : memref<1x16x16xf32, #tpu.memory_space<vmem>>, vector<1x16x16xf32>
    tpu.vector_store %arg6[%c0_7, %c0_8, %c0_9], %6 {strides = array<i32>} : memref<1x16x16xf32, #tpu.memory_space<vmem>>, vector<1x16x16xf32>,
    %c0_10 = arith.constant 0 : index
    %c0_11 = arith.constant 0 : index
    %c0_12 = arith.constant 0 : index
    %8 = vector.load %arg7[%c0_10, %c0_11, %c0_12] : memref<1x16x16xf32, #tpu.memory_space<vmem>>, vector<1x16x16xf32>
    %cst_13 = arith.constant dense<0xFF800000> : vector<1x16x16xf32>
    %9 = vector.multi_reduction <maximumf>, %0, %cst_13 [1] : vector<1x4x16x16xf32> to vector<1x16x16xf32>
    %10 = arith.maximumf %8, %9 : vector<1x16x16xf32>
    %c0_14 = arith.constant 0 : index
    %c0_15 = arith.constant 0 : index
    %c0_16 = arith.constant 0 : index
    %11 = vector.load %arg7[%c0_14, %c0_15, %c0_16] : memref<1x16x16xf32, #tpu.memory_space<vmem>>, vector<1x16x16xf32>
    tpu.vector_store %arg7[%c0_14, %c0_15, %c0_16], %10 {strides = array<i32>} : memref<1x16x16xf32, #tpu.memory_space<vmem>>, vector<1x16x16xf32>,
    %c0_i32_17 = arith.constant 0 : i32
    %12 = arith.cmpi eq, %arg1, %c0_i32_17 : i32
    %13 = arith.extui %12 : i1 to i32
    %c0_i32_18 = arith.constant 0 : i32
    %14 = arith.cmpi ne, %13, %c0_i32_18 : i32
    scf.if %14 {
      %cst_19 = arith.constant 0.000000e+00 : f32
      %15 = vector.broadcast %cst_19 : f32 to vector<1x16x128xf32>
      %c0_20 = arith.constant 0 : index
      %c0_21 = arith.constant 0 : index
      %c0_22 = arith.constant 0 : index
      %16 = vector.load %arg6[%c0_20, %c0_21, %c0_22] : memref<1x16x16xf32, #tpu.memory_space<vmem>>, vector<1x16x16xf32>
      %17 = vector.extract_strided_slice %16 {offsets = [0, 3, 0], sizes = [1, 1, 16], strides = [1, 1, 1]} : vector<1x16x16xf32> to vector<1x1x16xf32>
      %18 = vector.extract_strided_slice %16 {offsets = [0, 2, 0], sizes = [1, 1, 16], strides = [1, 1, 1]} : vector<1x16x16xf32> to vector<1x1x16xf32>
      %19 = vector.extract_strided_slice %16 {offsets = [0, 1, 0], sizes = [1, 1, 16], strides = [1, 1, 1]} : vector<1x16x16xf32> to vector<1x1x16xf32>
      %20 = vector.extract_strided_slice %16 {offsets = [0, 14, 0], sizes = [1, 1, 16], strides = [1, 1, 1]} : vector<1x16x16xf32> to vector<1x1x16xf32>
      %21 = vector.extract_strided_slice %16 {offsets = [0, 13, 0], sizes = [1, 1, 16], strides = [1, 1, 1]} : vector<1x16x16xf32> to vector<1x1x16xf32>
      %22 = vector.extract_strided_slice %16 {offsets = [0, 12, 0], sizes = [1, 1, 16], strides = [1, 1, 1]} : vector<1x16x16xf32> to vector<1x1x16xf32>
      %23 = tpu.concatenate %17, %18, %19, %16, %20, %21, %22 in 1 : vector<1x1x16xf32>, vector<1x1x16xf32>, vector<1x1x16xf32>, vector<1x16x16xf32>, vector<1x1x16xf32>, vector<1x1x16xf32>, vector<1x1x16xf32> -> vector<1x22x16xf32>
      %24 = vector.extract_strided_slice %23 {offsets = [0, 0, 3], sizes = [1, 22, 1], strides = [1, 1, 1]} : vector<1x22x16xf32> to vector<1x22x1xf32>
      %25 = vector.extract_strided_slice %23 {offsets = [0, 0, 2], sizes = [1, 22, 1], strides = [1, 1, 1]} : vector<1x22x16xf32> to vector<1x22x1xf32>
      %26 = vector.extract_strided_slice %23 {offsets = [0, 0, 1], sizes = [1, 22, 1], strides = [1, 1, 1]} : vector<1x22x16xf32> to vector<1x22x1xf32>
      %27 = vector.extract_strided_slice %23 {offsets = [0, 0, 14], sizes = [1, 22, 1], strides = [1, 1, 1]} : vector<1x22x16xf32> to vector<1x22x1xf32>
      %28 = vector.extract_strided_slice %23 {offsets = [0, 0, 13], sizes = [1, 22, 1], strides = [1, 1, 1]} : vector<1x22x16xf32> to vector<1x22x1xf32>
      %29 = vector.extract_strided_slice %23 {offsets = [0, 0, 12], sizes = [1, 22, 1], strides = [1, 1, 1]} : vector<1x22x16xf32> to vector<1x22x1xf32>
      %cst_23 = arith.constant 0.000000e+00 : f32
      %30 = vector.broadcast %cst_23 : f32 to vector<1x22x106xf32>
      %31 = tpu.concatenate %24, %25, %26, %23, %27, %28, %29, %30 in 2 : vector<1x22x1xf32>, vector<1x22x1xf32>, vector<1x22x1xf32>, vector<1x22x16xf32>, vector<1x22x1xf32>, vector<1x22x1xf32>, vector<1x22x1xf32>, vector<1x22x106xf32> -> vector<1x22x128xf32>
      %32 = vector.extract_strided_slice %31 {offsets = [0, 0, 0], sizes = [1, 16, 128], strides = [1, 1, 1]} : vector<1x22x128xf32> to vector<1x16x128xf32>
      %c0_24 = arith.constant 0 : index
      %33 = memref.load %arg2[%c0_24] : memref<98xf32, #tpu.memory_space<smem>>
      %34 = vector.broadcast %33 : f32 to vector<1x16x128xf32>
      %35 = arith.mulf %34, %32 : vector<1x16x128xf32>
      %36 = arith.addf %15, %35 : vector<1x16x128xf32>
      %c127_i32 = arith.constant 127 : i32
      %37 = tpu.dynamic_rotate %32 by %c127_i32 dim 2 : vector<1x16x128xf32>, i32 -> vector<1x16x128xf32>
      %c1 = arith.constant 1 : index
      %38 = memref.load %arg2[%c1] : memref<98xf32, #tpu.memory_space<smem>>
      %39 = vector.broadcast %38 : f32 to vector<1x16x128xf32>
      %40 = arith.mulf %39, %37 : vector<1x16x128xf32>
      %41 = arith.addf %36, %40 : vector<1x16x128xf32>
      %c126_i32 = arith.constant 126 : i32
      %42 = tpu.dynamic_rotate %32 by %c126_i32 dim 2 : vector<1x16x128xf32>, i32 -> vector<1x16x128xf32>
      %c2 = arith.constant 2 : index
      %43 = memref.load %arg2[%c2] : memref<98xf32, #tpu.memory_space<smem>>
      %44 = vector.broadcast %43 : f32 to vector<1x16x128xf32>
      %45 = arith.mulf %44, %42 : vector<1x16x128xf32>
      %46 = arith.addf %41, %45 : vector<1x16x128xf32>
      %c125_i32 = arith.constant 125 : i32
      %47 = tpu.dynamic_rotate %32 by %c125_i32 dim 2 : vector<1x16x128xf32>, i32 -> vector<1x16x128xf32>
      %c3 = arith.constant 3 : index
      %48 = memref.load %arg2[%c3] : memref<98xf32, #tpu.memory_space<smem>>
      %49 = vector.broadcast %48 : f32 to vector<1x16x128xf32>
      %50 = arith.mulf %49, %47 : vector<1x16x128xf32>
      %51 = arith.addf %46, %50 : vector<1x16x128xf32>
      %c124_i32 = arith.constant 124 : i32
      %52 = tpu.dynamic_rotate %32 by %c124_i32 dim 2 : vector<1x16x128xf32>, i32 -> vector<1x16x128xf32>
      %c4 = arith.constant 4 : index
      %53 = memref.load %arg2[%c4] : memref<98xf32, #tpu.memory_space<smem>>
      %54 = vector.broadcast %53 : f32 to vector<1x16x128xf32>
      %55 = arith.mulf %54, %52 : vector<1x16x128xf32>
      %56 = arith.addf %51, %55 : vector<1x16x128xf32>
      %c123_i32 = arith.constant 123 : i32
      %57 = tpu.dynamic_rotate %32 by %c123_i32 dim 2 : vector<1x16x128xf32>, i32 -> vector<1x16x128xf32>
      %c5 = arith.constant 5 : index
      %58 = memref.load %arg2[%c5] : memref<98xf32, #tpu.memory_space<smem>>
      %59 = vector.broadcast %58 : f32 to vector<1x16x128xf32>
      %60 = arith.mulf %59, %57 : vector<1x16x128xf32>
      %61 = arith.addf %56, %60 : vector<1x16x128xf32>
      %c122_i32 = arith.constant 122 : i32
      %62 = tpu.dynamic_rotate %32 by %c122_i32 dim 2 : vector<1x16x128xf32>, i32 -> vector<1x16x128xf32>
      %c6 = arith.constant 6 : index
      %63 = memref.load %arg2[%c6] : memref<98xf32, #tpu.memory_space<smem>>
      %64 = vector.broadcast %63 : f32 to vector<1x16x128xf32>
      %65 = arith.mulf %64, %62 : vector<1x16x128xf32>
      %66 = arith.addf %61, %65 : vector<1x16x128xf32>
      %67 = vector.extract_strided_slice %31 {offsets = [0, 1, 0], sizes = [1, 16, 128], strides = [1, 1, 1]} : vector<1x22x128xf32> to vector<1x16x128xf32>
      %c7 = arith.constant 7 : index
      %68 = memref.load %arg2[%c7] : memref<98xf32, #tpu.memory_space<smem>>
      %69 = vector.broadcast %68 : f32 to vector<1x16x128xf32>
      %70 = arith.mulf %69, %67 : vector<1x16x128xf32>
      %71 = arith.addf %66, %70 : vector<1x16x128xf32>
      %c127_i32_25 = arith.constant 127 : i32
      %72 = tpu.dynamic_rotate %67 by %c127_i32_25 dim 2 : vector<1x16x128xf32>, i32 -> vector<1x16x128xf32>
      %c8 = arith.constant 8 : index
      %73 = memref.load %arg2[%c8] : memref<98xf32, #tpu.memory_space<smem>>
      %74 = vector.broadcast %73 : f32 to vector<1x16x128xf32>
      %75 = arith.mulf %74, %72 : vector<1x16x128xf32>
      %76 = arith.addf %71, %75 : vector<1x16x128xf32>
      %c126_i32_26 = arith.constant 126 : i32
      %77 = tpu.dynamic_rotate %67 by %c126_i32_26 dim 2 : vector<1x16x128xf32>, i32 -> vector<1x16x128xf32>
      %c9 = arith.constant 9 : index
      %78 = memref.load %arg2[%c9] : memref<98xf32, #tpu.memory_space<smem>>
      %79 = vector.broadcast %78 : f32 to vector<1x16x128xf32>
      %80 = arith.mulf %79, %77 : vector<1x16x128xf32>
      %81 = arith.addf %76, %80 : vector<1x16x128xf32>
      %c125_i32_27 = arith.constant 125 : i32
      %82 = tpu.dynamic_rotate %67 by %c125_i32_27 dim 2 : vector<1x16x128xf32>, i32 -> vector<1x16x128xf32>
      %c10 = arith.constant 10 : index
      %83 = memref.load %arg2[%c10] : memref<98xf32, #tpu.memory_space<smem>>
      %84 = vector.broadcast %83 : f32 to vector<1x16x128xf32>
      %85 = arith.mulf %84, %82 : vector<1x16x128xf32>
      %86 = arith.addf %81, %85 : vector<1x16x128xf32>
      %c124_i32_28 = arith.constant 124 : i32
      %87 = tpu.dynamic_rotate %67 by %c124_i32_28 dim 2 : vector<1x16x128xf32>, i32 -> vector<1x16x128xf32>
      %c11 = arith.constant 11 : index
      %88 = memref.load %arg2[%c11] : memref<98xf32, #tpu.memory_space<smem>>
      %89 = vector.broadcast %88 : f32 to vector<1x16x128xf32>
      %90 = arith.mulf %89, %87 : vector<1x16x128xf32>
      %91 = arith.addf %86, %90 : vector<1x16x128xf32>
      %c123_i32_29 = arith.constant 123 : i32
      %92 = tpu.dynamic_rotate %67 by %c123_i32_29 dim 2 : vector<1x16x128xf32>, i32 -> vector<1x16x128xf32>
      %c12 = arith.constant 12 : index
      %93 = memref.load %arg2[%c12] : memref<98xf32, #tpu.memory_space<smem>>
      %94 = vector.broadcast %93 : f32 to vector<1x16x128xf32>
      %95 = arith.mulf %94, %92 : vector<1x16x128xf32>
      %96 = arith.addf %91, %95 : vector<1x16x128xf32>
      %c122_i32_30 = arith.constant 122 : i32
      %97 = tpu.dynamic_rotate %67 by %c122_i32_30 dim 2 : vector<1x16x128xf32>, i32 -> vector<1x16x128xf32>
      %c13 = arith.constant 13 : index
      %98 = memref.load %arg2[%c13] : memref<98xf32, #tpu.memory_space<smem>>
      %99 = vector.broadcast %98 : f32 to vector<1x16x128xf32>
      %100 = arith.mulf %99, %97 : vector<1x16x128xf32>
      %101 = arith.addf %96, %100 : vector<1x16x128xf32>
      %102 = vector.extract_strided_slice %31 {offsets = [0, 2, 0], sizes = [1, 16, 128], strides = [1, 1, 1]} : vector<1x22x128xf32> to vector<1x16x128xf32>
      %c14 = arith.constant 14 : index
      %103 = memref.load %arg2[%c14] : memref<98xf32, #tpu.memory_space<smem>>
      %104 = vector.broadcast %103 : f32 to vector<1x16x128xf32>
      %105 = arith.mulf %104, %102 : vector<1x16x128xf32>
      %106 = arith.addf %101, %105 : vector<1x16x128xf32>
      %c127_i32_31 = arith.constant 127 : i32
      %107 = tpu.dynamic_rotate %102 by %c127_i32_31 dim 2 : vector<1x16x128xf32>, i32 -> vector<1x16x128xf32>
      %c15 = arith.constant 15 : index
      %108 = memref.load %arg2[%c15] : memref<98xf32, #tpu.memory_space<smem>>
      %109 = vector.broadcast %108 : f32 to vector<1x16x128xf32>
      %110 = arith.mulf %109, %107 : vector<1x16x128xf32>
      %111 = arith.addf %106, %110 : vector<1x16x128xf32>
      %c126_i32_32 = arith.constant 126 : i32
      %112 = tpu.dynamic_rotate %102 by %c126_i32_32 dim 2 : vector<1x16x128xf32>, i32 -> vector<1x16x128xf32>
      %c16 = arith.constant 16 : index
      %113 = memref.load %arg2[%c16] : memref<98xf32, #tpu.memory_space<smem>>
      %114 = vector.broadcast %113 : f32 to vector<1x16x128xf32>
      %115 = arith.mulf %114, %112 : vector<1x16x128xf32>
      %116 = arith.addf %111, %115 : vector<1x16x128xf32>
      %c125_i32_33 = arith.constant 125 : i32
      %117 = tpu.dynamic_rotate %102 by %c125_i32_33 dim 2 : vector<1x16x128xf32>, i32 -> vector<1x16x128xf32>
      %c17 = arith.constant 17 : index
      %118 = memref.load %arg2[%c17] : memref<98xf32, #tpu.memory_space<smem>>
      %119 = vector.broadcast %118 : f32 to vector<1x16x128xf32>
      %120 = arith.mulf %119, %117 : vector<1x16x128xf32>
      %121 = arith.addf %116, %120 : vector<1x16x128xf32>
      %c124_i32_34 = arith.constant 124 : i32
      %122 = tpu.dynamic_rotate %102 by %c124_i32_34 dim 2 : vector<1x16x128xf32>, i32 -> vector<1x16x128xf32>
      %c18 = arith.constant 18 : index
      %123 = memref.load %arg2[%c18] : memref<98xf32, #tpu.memory_space<smem>>
      %124 = vector.broadcast %123 : f32 to vector<1x16x128xf32>
      %125 = arith.mulf %124, %122 : vector<1x16x128xf32>
      %126 = arith.addf %121, %125 : vector<1x16x128xf32>
      %c123_i32_35 = arith.constant 123 : i32
      %127 = tpu.dynamic_rotate %102 by %c123_i32_35 dim 2 : vector<1x16x128xf32>, i32 -> vector<1x16x128xf32>
      %c19 = arith.constant 19 : index
      %128 = memref.load %arg2[%c19] : memref<98xf32, #tpu.memory_space<smem>>
      %129 = vector.broadcast %128 : f32 to vector<1x16x128xf32>
      %130 = arith.mulf %129, %127 : vector<1x16x128xf32>
      %131 = arith.addf %126, %130 : vector<1x16x128xf32>
      %c122_i32_36 = arith.constant 122 : i32
      %132 = tpu.dynamic_rotate %102 by %c122_i32_36 dim 2 : vector<1x16x128xf32>, i32 -> vector<1x16x128xf32>
      %c20 = arith.constant 20 : index
      %133 = memref.load %arg2[%c20] : memref<98xf32, #tpu.memory_space<smem>>
      %134 = vector.broadcast %133 : f32 to vector<1x16x128xf32>
      %135 = arith.mulf %134, %132 : vector<1x16x128xf32>
      %136 = arith.addf %131, %135 : vector<1x16x128xf32>
      %137 = vector.extract_strided_slice %31 {offsets = [0, 3, 0], sizes = [1, 16, 128], strides = [1, 1, 1]} : vector<1x22x128xf32> to vector<1x16x128xf32>
      %c21 = arith.constant 21 : index
      %138 = memref.load %arg2[%c21] : memref<98xf32, #tpu.memory_space<smem>>
      %139 = vector.broadcast %138 : f32 to vector<1x16x128xf32>
      %140 = arith.mulf %139, %137 : vector<1x16x128xf32>
      %141 = arith.addf %136, %140 : vector<1x16x128xf32>
      %c127_i32_37 = arith.constant 127 : i32
      %142 = tpu.dynamic_rotate %137 by %c127_i32_37 dim 2 : vector<1x16x128xf32>, i32 -> vector<1x16x128xf32>
      %c22 = arith.constant 22 : index
      %143 = memref.load %arg2[%c22] : memref<98xf32, #tpu.memory_space<smem>>
      %144 = vector.broadcast %143 : f32 to vector<1x16x128xf32>
      %145 = arith.mulf %144, %142 : vector<1x16x128xf32>
      %146 = arith.addf %141, %145 : vector<1x16x128xf32>
      %c126_i32_38 = arith.constant 126 : i32
      %147 = tpu.dynamic_rotate %137 by %c126_i32_38 dim 2 : vector<1x16x128xf32>, i32 -> vector<1x16x128xf32>
      %c23 = arith.constant 23 : index
      %148 = memref.load %arg2[%c23] : memref<98xf32, #tpu.memory_space<smem>>
      %149 = vector.broadcast %148 : f32 to vector<1x16x128xf32>
      %150 = arith.mulf %149, %147 : vector<1x16x128xf32>
      %151 = arith.addf %146, %150 : vector<1x16x128xf32>
      %c125_i32_39 = arith.constant 125 : i32
      %152 = tpu.dynamic_rotate %137 by %c125_i32_39 dim 2 : vector<1x16x128xf32>, i32 -> vector<1x16x128xf32>
      %c24 = arith.constant 24 : index
      %153 = memref.load %arg2[%c24] : memref<98xf32, #tpu.memory_space<smem>>
      %154 = vector.broadcast %153 : f32 to vector<1x16x128xf32>
      %155 = arith.mulf %154, %152 : vector<1x16x128xf32>
      %156 = arith.addf %151, %155 : vector<1x16x128xf32>
      %c124_i32_40 = arith.constant 124 : i32
      %157 = tpu.dynamic_rotate %137 by %c124_i32_40 dim 2 : vector<1x16x128xf32>, i32 -> vector<1x16x128xf32>
      %c25 = arith.constant 25 : index
      %158 = memref.load %arg2[%c25] : memref<98xf32, #tpu.memory_space<smem>>
      %159 = vector.broadcast %158 : f32 to vector<1x16x128xf32>
      %160 = arith.mulf %159, %157 : vector<1x16x128xf32>
      %161 = arith.addf %156, %160 : vector<1x16x128xf32>
      %c123_i32_41 = arith.constant 123 : i32
      %162 = tpu.dynamic_rotate %137 by %c123_i32_41 dim 2 : vector<1x16x128xf32>, i32 -> vector<1x16x128xf32>
      %c26 = arith.constant 26 : index
      %163 = memref.load %arg2[%c26] : memref<98xf32, #tpu.memory_space<smem>>
      %164 = vector.broadcast %163 : f32 to vector<1x16x128xf32>
      %165 = arith.mulf %164, %162 : vector<1x16x128xf32>
      %166 = arith.addf %161, %165 : vector<1x16x128xf32>
      %c122_i32_42 = arith.constant 122 : i32
      %167 = tpu.dynamic_rotate %137 by %c122_i32_42 dim 2 : vector<1x16x128xf32>, i32 -> vector<1x16x128xf32>
      %c27 = arith.constant 27 : index
      %168 = memref.load %arg2[%c27] : memref<98xf32, #tpu.memory_space<smem>>
      %169 = vector.broadcast %168 : f32 to vector<1x16x128xf32>
      %170 = arith.mulf %169, %167 : vector<1x16x128xf32>
      %171 = arith.addf %166, %170 : vector<1x16x128xf32>
      %172 = vector.extract_strided_slice %31 {offsets = [0, 4, 0], sizes = [1, 16, 128], strides = [1, 1, 1]} : vector<1x22x128xf32> to vector<1x16x128xf32>
      %c28 = arith.constant 28 : index
      %173 = memref.load %arg2[%c28] : memref<98xf32, #tpu.memory_space<smem>>
      %174 = vector.broadcast %173 : f32 to vector<1x16x128xf32>
      %175 = arith.mulf %174, %172 : vector<1x16x128xf32>
      %176 = arith.addf %171, %175 : vector<1x16x128xf32>
      %c127_i32_43 = arith.constant 127 : i32
      %177 = tpu.dynamic_rotate %172 by %c127_i32_43 dim 2 : vector<1x16x128xf32>, i32 -> vector<1x16x128xf32>
      %c29 = arith.constant 29 : index
      %178 = memref.load %arg2[%c29] : memref<98xf32, #tpu.memory_space<smem>>
      %179 = vector.broadcast %178 : f32 to vector<1x16x128xf32>
      %180 = arith.mulf %179, %177 : vector<1x16x128xf32>
      %181 = arith.addf %176, %180 : vector<1x16x128xf32>
      %c126_i32_44 = arith.constant 126 : i32
      %182 = tpu.dynamic_rotate %172 by %c126_i32_44 dim 2 : vector<1x16x128xf32>, i32 -> vector<1x16x128xf32>
      %c30 = arith.constant 30 : index
      %183 = memref.load %arg2[%c30] : memref<98xf32, #tpu.memory_space<smem>>
      %184 = vector.broadcast %183 : f32 to vector<1x16x128xf32>
      %185 = arith.mulf %184, %182 : vector<1x16x128xf32>
      %186 = arith.addf %181, %185 : vector<1x16x128xf32>
      %c125_i32_45 = arith.constant 125 : i32
      %187 = tpu.dynamic_rotate %172 by %c125_i32_45 dim 2 : vector<1x16x128xf32>, i32 -> vector<1x16x128xf32>
      %c31 = arith.constant 31 : index
      %188 = memref.load %arg2[%c31] : memref<98xf32, #tpu.memory_space<smem>>
      %189 = vector.broadcast %188 : f32 to vector<1x16x128xf32>
      %190 = arith.mulf %189, %187 : vector<1x16x128xf32>
      %191 = arith.addf %186, %190 : vector<1x16x128xf32>
      %c124_i32_46 = arith.constant 124 : i32
      %192 = tpu.dynamic_rotate %172 by %c124_i32_46 dim 2 : vector<1x16x128xf32>, i32 -> vector<1x16x128xf32>
      %c32 = arith.constant 32 : index
      %193 = memref.load %arg2[%c32] : memref<98xf32, #tpu.memory_space<smem>>
      %194 = vector.broadcast %193 : f32 to vector<1x16x128xf32>
      %195 = arith.mulf %194, %192 : vector<1x16x128xf32>
      %196 = arith.addf %191, %195 : vector<1x16x128xf32>
      %c123_i32_47 = arith.constant 123 : i32
      %197 = tpu.dynamic_rotate %172 by %c123_i32_47 dim 2 : vector<1x16x128xf32>, i32 -> vector<1x16x128xf32>
      %c33 = arith.constant 33 : index
      %198 = memref.load %arg2[%c33] : memref<98xf32, #tpu.memory_space<smem>>
      %199 = vector.broadcast %198 : f32 to vector<1x16x128xf32>
      %200 = arith.mulf %199, %197 : vector<1x16x128xf32>
      %201 = arith.addf %196, %200 : vector<1x16x128xf32>
      %c122_i32_48 = arith.constant 122 : i32
      %202 = tpu.dynamic_rotate %172 by %c122_i32_48 dim 2 : vector<1x16x128xf32>, i32 -> vector<1x16x128xf32>
      %c34 = arith.constant 34 : index
      %203 = memref.load %arg2[%c34] : memref<98xf32, #tpu.memory_space<smem>>
      %204 = vector.broadcast %203 : f32 to vector<1x16x128xf32>
      %205 = arith.mulf %204, %202 : vector<1x16x128xf32>
      %206 = arith.addf %201, %205 : vector<1x16x128xf32>
      %207 = vector.extract_strided_slice %31 {offsets = [0, 5, 0], sizes = [1, 16, 128], strides = [1, 1, 1]} : vector<1x22x128xf32> to vector<1x16x128xf32>
      %c35 = arith.constant 35 : index
      %208 = memref.load %arg2[%c35] : memref<98xf32, #tpu.memory_space<smem>>
      %209 = vector.broadcast %208 : f32 to vector<1x16x128xf32>
      %210 = arith.mulf %209, %207 : vector<1x16x128xf32>
      %211 = arith.addf %206, %210 : vector<1x16x128xf32>
      %c127_i32_49 = arith.constant 127 : i32
      %212 = tpu.dynamic_rotate %207 by %c127_i32_49 dim 2 : vector<1x16x128xf32>, i32 -> vector<1x16x128xf32>
      %c36 = arith.constant 36 : index
      %213 = memref.load %arg2[%c36] : memref<98xf32, #tpu.memory_space<smem>>
      %214 = vector.broadcast %213 : f32 to vector<1x16x128xf32>
      %215 = arith.mulf %214, %212 : vector<1x16x128xf32>
      %216 = arith.addf %211, %215 : vector<1x16x128xf32>
      %c126_i32_50 = arith.constant 126 : i32
      %217 = tpu.dynamic_rotate %207 by %c126_i32_50 dim 2 : vector<1x16x128xf32>, i32 -> vector<1x16x128xf32>
      %c37 = arith.constant 37 : index
      %218 = memref.load %arg2[%c37] : memref<98xf32, #tpu.memory_space<smem>>
      %219 = vector.broadcast %218 : f32 to vector<1x16x128xf32>
      %220 = arith.mulf %219, %217 : vector<1x16x128xf32>
      %221 = arith.addf %216, %220 : vector<1x16x128xf32>
      %c125_i32_51 = arith.constant 125 : i32
      %222 = tpu.dynamic_rotate %207 by %c125_i32_51 dim 2 : vector<1x16x128xf32>, i32 -> vector<1x16x128xf32>
      %c38 = arith.constant 38 : index
      %223 = memref.load %arg2[%c38] : memref<98xf32, #tpu.memory_space<smem>>
      %224 = vector.broadcast %223 : f32 to vector<1x16x128xf32>
      %225 = arith.mulf %224, %222 : vector<1x16x128xf32>
      %226 = arith.addf %221, %225 : vector<1x16x128xf32>
      %c124_i32_52 = arith.constant 124 : i32
      %227 = tpu.dynamic_rotate %207 by %c124_i32_52 dim 2 : vector<1x16x128xf32>, i32 -> vector<1x16x128xf32>
      %c39 = arith.constant 39 : index
      %228 = memref.load %arg2[%c39] : memref<98xf32, #tpu.memory_space<smem>>
      %229 = vector.broadcast %228 : f32 to vector<1x16x128xf32>
      %230 = arith.mulf %229, %227 : vector<1x16x128xf32>
      %231 = arith.addf %226, %230 : vector<1x16x128xf32>
      %c123_i32_53 = arith.constant 123 : i32
      %232 = tpu.dynamic_rotate %207 by %c123_i32_53 dim 2 : vector<1x16x128xf32>, i32 -> vector<1x16x128xf32>
      %c40 = arith.constant 40 : index
      %233 = memref.load %arg2[%c40] : memref<98xf32, #tpu.memory_space<smem>>
      %234 = vector.broadcast %233 : f32 to vector<1x16x128xf32>
      %235 = arith.mulf %234, %232 : vector<1x16x128xf32>
      %236 = arith.addf %231, %235 : vector<1x16x128xf32>
      %c122_i32_54 = arith.constant 122 : i32
      %237 = tpu.dynamic_rotate %207 by %c122_i32_54 dim 2 : vector<1x16x128xf32>, i32 -> vector<1x16x128xf32>
      %c41 = arith.constant 41 : index
      %238 = memref.load %arg2[%c41] : memref<98xf32, #tpu.memory_space<smem>>
      %239 = vector.broadcast %238 : f32 to vector<1x16x128xf32>
      %240 = arith.mulf %239, %237 : vector<1x16x128xf32>
      %241 = arith.addf %236, %240 : vector<1x16x128xf32>
      %242 = vector.extract_strided_slice %31 {offsets = [0, 6, 0], sizes = [1, 16, 128], strides = [1, 1, 1]} : vector<1x22x128xf32> to vector<1x16x128xf32>
      %c42 = arith.constant 42 : index
      %243 = memref.load %arg2[%c42] : memref<98xf32, #tpu.memory_space<smem>>
      %244 = vector.broadcast %243 : f32 to vector<1x16x128xf32>
      %245 = arith.mulf %244, %242 : vector<1x16x128xf32>
      %246 = arith.addf %241, %245 : vector<1x16x128xf32>
      %c127_i32_55 = arith.constant 127 : i32
      %247 = tpu.dynamic_rotate %242 by %c127_i32_55 dim 2 : vector<1x16x128xf32>, i32 -> vector<1x16x128xf32>
      %c43 = arith.constant 43 : index
      %248 = memref.load %arg2[%c43] : memref<98xf32, #tpu.memory_space<smem>>
      %249 = vector.broadcast %248 : f32 to vector<1x16x128xf32>
      %250 = arith.mulf %249, %247 : vector<1x16x128xf32>
      %251 = arith.addf %246, %250 : vector<1x16x128xf32>
      %c126_i32_56 = arith.constant 126 : i32
      %252 = tpu.dynamic_rotate %242 by %c126_i32_56 dim 2 : vector<1x16x128xf32>, i32 -> vector<1x16x128xf32>
      %c44 = arith.constant 44 : index
      %253 = memref.load %arg2[%c44] : memref<98xf32, #tpu.memory_space<smem>>
      %254 = vector.broadcast %253 : f32 to vector<1x16x128xf32>
      %255 = arith.mulf %254, %252 : vector<1x16x128xf32>
      %256 = arith.addf %251, %255 : vector<1x16x128xf32>
      %c125_i32_57 = arith.constant 125 : i32
      %257 = tpu.dynamic_rotate %242 by %c125_i32_57 dim 2 : vector<1x16x128xf32>, i32 -> vector<1x16x128xf32>
      %c45 = arith.constant 45 : index
      %258 = memref.load %arg2[%c45] : memref<98xf32, #tpu.memory_space<smem>>
      %259 = vector.broadcast %258 : f32 to vector<1x16x128xf32>
      %260 = arith.mulf %259, %257 : vector<1x16x128xf32>
      %261 = arith.addf %256, %260 : vector<1x16x128xf32>
      %c124_i32_58 = arith.constant 124 : i32
      %262 = tpu.dynamic_rotate %242 by %c124_i32_58 dim 2 : vector<1x16x128xf32>, i32 -> vector<1x16x128xf32>
      %c46 = arith.constant 46 : index
      %263 = memref.load %arg2[%c46] : memref<98xf32, #tpu.memory_space<smem>>
      %264 = vector.broadcast %263 : f32 to vector<1x16x128xf32>
      %265 = arith.mulf %264, %262 : vector<1x16x128xf32>
      %266 = arith.addf %261, %265 : vector<1x16x128xf32>
      %c123_i32_59 = arith.constant 123 : i32
      %267 = tpu.dynamic_rotate %242 by %c123_i32_59 dim 2 : vector<1x16x128xf32>, i32 -> vector<1x16x128xf32>
      %c47 = arith.constant 47 : index
      %268 = memref.load %arg2[%c47] : memref<98xf32, #tpu.memory_space<smem>>
      %269 = vector.broadcast %268 : f32 to vector<1x16x128xf32>
      %270 = arith.mulf %269, %267 : vector<1x16x128xf32>
      %271 = arith.addf %266, %270 : vector<1x16x128xf32>
      %c122_i32_60 = arith.constant 122 : i32
      %272 = tpu.dynamic_rotate %242 by %c122_i32_60 dim 2 : vector<1x16x128xf32>, i32 -> vector<1x16x128xf32>
      %c48 = arith.constant 48 : index
      %273 = memref.load %arg2[%c48] : memref<98xf32, #tpu.memory_space<smem>>
      %274 = vector.broadcast %273 : f32 to vector<1x16x128xf32>
      %275 = arith.mulf %274, %272 : vector<1x16x128xf32>
      %276 = arith.addf %271, %275 : vector<1x16x128xf32>
      %c0_61 = arith.constant 0 : index
      %c0_62 = arith.constant 0 : index
      %c0_63 = arith.constant 0 : index
      %277 = vector.load %arg7[%c0_61, %c0_62, %c0_63] : memref<1x16x16xf32, #tpu.memory_space<vmem>>, vector<1x16x16xf32>
      %278 = vector.extract_strided_slice %277 {offsets = [0, 3, 0], sizes = [1, 1, 16], strides = [1, 1, 1]} : vector<1x16x16xf32> to vector<1x1x16xf32>
      %279 = vector.extract_strided_slice %277 {offsets = [0, 2, 0], sizes = [1, 1, 16], strides = [1, 1, 1]} : vector<1x16x16xf32> to vector<1x1x16xf32>
      %280 = vector.extract_strided_slice %277 {offsets = [0, 1, 0], sizes = [1, 1, 16], strides = [1, 1, 1]} : vector<1x16x16xf32> to vector<1x1x16xf32>
      %281 = vector.extract_strided_slice %277 {offsets = [0, 14, 0], sizes = [1, 1, 16], strides = [1, 1, 1]} : vector<1x16x16xf32> to vector<1x1x16xf32>
      %282 = vector.extract_strided_slice %277 {offsets = [0, 13, 0], sizes = [1, 1, 16], strides = [1, 1, 1]} : vector<1x16x16xf32> to vector<1x1x16xf32>
      %283 = vector.extract_strided_slice %277 {offsets = [0, 12, 0], sizes = [1, 1, 16], strides = [1, 1, 1]} : vector<1x16x16xf32> to vector<1x1x16xf32>
      %284 = tpu.concatenate %278, %279, %280, %277, %281, %282, %283 in 1 : vector<1x1x16xf32>, vector<1x1x16xf32>, vector<1x1x16xf32>, vector<1x16x16xf32>, vector<1x1x16xf32>, vector<1x1x16xf32>, vector<1x1x16xf32> -> vector<1x22x16xf32>
      %285 = vector.extract_strided_slice %284 {offsets = [0, 0, 3], sizes = [1, 22, 1], strides = [1, 1, 1]} : vector<1x22x16xf32> to vector<1x22x1xf32>
      %286 = vector.extract_strided_slice %284 {offsets = [0, 0, 2], sizes = [1, 22, 1], strides = [1, 1, 1]} : vector<1x22x16xf32> to vector<1x22x1xf32>
      %287 = vector.extract_strided_slice %284 {offsets = [0, 0, 1], sizes = [1, 22, 1], strides = [1, 1, 1]} : vector<1x22x16xf32> to vector<1x22x1xf32>
      %288 = vector.extract_strided_slice %284 {offsets = [0, 0, 14], sizes = [1, 22, 1], strides = [1, 1, 1]} : vector<1x22x16xf32> to vector<1x22x1xf32>
      %289 = vector.extract_strided_slice %284 {offsets = [0, 0, 13], sizes = [1, 22, 1], strides = [1, 1, 1]} : vector<1x22x16xf32> to vector<1x22x1xf32>
      %290 = vector.extract_strided_slice %284 {offsets = [0, 0, 12], sizes = [1, 22, 1], strides = [1, 1, 1]} : vector<1x22x16xf32> to vector<1x22x1xf32>
      %cst_64 = arith.constant 0.000000e+00 : f32
      %291 = vector.broadcast %cst_64 : f32 to vector<1x22x106xf32>
      %292 = tpu.concatenate %285, %286, %287, %284, %288, %289, %290, %291 in 2 : vector<1x22x1xf32>, vector<1x22x1xf32>, vector<1x22x1xf32>, vector<1x22x16xf32>, vector<1x22x1xf32>, vector<1x22x1xf32>, vector<1x22x1xf32>, vector<1x22x106xf32> -> vector<1x22x128xf32>
      %293 = vector.extract_strided_slice %292 {offsets = [0, 0, 0], sizes = [1, 16, 128], strides = [1, 1, 1]} : vector<1x22x128xf32> to vector<1x16x128xf32>
      %c49 = arith.constant 49 : index
      %294 = memref.load %arg2[%c49] : memref<98xf32, #tpu.memory_space<smem>>
      %295 = vector.broadcast %294 : f32 to vector<1x16x128xf32>
      %296 = arith.mulf %295, %293 : vector<1x16x128xf32>
      %297 = arith.addf %276, %296 : vector<1x16x128xf32>
      %c127_i32_65 = arith.constant 127 : i32
      %298 = tpu.dynamic_rotate %293 by %c127_i32_65 dim 2 : vector<1x16x128xf32>, i32 -> vector<1x16x128xf32>
      %c50 = arith.constant 50 : index
      %299 = memref.load %arg2[%c50] : memref<98xf32, #tpu.memory_space<smem>>
      %300 = vector.broadcast %299 : f32 to vector<1x16x128xf32>
      %301 = arith.mulf %300, %298 : vector<1x16x128xf32>
      %302 = arith.addf %297, %301 : vector<1x16x128xf32>
      %c126_i32_66 = arith.constant 126 : i32
      %303 = tpu.dynamic_rotate %293 by %c126_i32_66 dim 2 : vector<1x16x128xf32>, i32 -> vector<1x16x128xf32>
      %c51 = arith.constant 51 : index
      %304 = memref.load %arg2[%c51] : memref<98xf32, #tpu.memory_space<smem>>
      %305 = vector.broadcast %304 : f32 to vector<1x16x128xf32>
      %306 = arith.mulf %305, %303 : vector<1x16x128xf32>
      %307 = arith.addf %302, %306 : vector<1x16x128xf32>
      %c125_i32_67 = arith.constant 125 : i32
      %308 = tpu.dynamic_rotate %293 by %c125_i32_67 dim 2 : vector<1x16x128xf32>, i32 -> vector<1x16x128xf32>
      %c52 = arith.constant 52 : index
      %309 = memref.load %arg2[%c52] : memref<98xf32, #tpu.memory_space<smem>>
      %310 = vector.broadcast %309 : f32 to vector<1x16x128xf32>
      %311 = arith.mulf %310, %308 : vector<1x16x128xf32>
      %312 = arith.addf %307, %311 : vector<1x16x128xf32>
      %c124_i32_68 = arith.constant 124 : i32
      %313 = tpu.dynamic_rotate %293 by %c124_i32_68 dim 2 : vector<1x16x128xf32>, i32 -> vector<1x16x128xf32>
      %c53 = arith.constant 53 : index
      %314 = memref.load %arg2[%c53] : memref<98xf32, #tpu.memory_space<smem>>
      %315 = vector.broadcast %314 : f32 to vector<1x16x128xf32>
      %316 = arith.mulf %315, %313 : vector<1x16x128xf32>
      %317 = arith.addf %312, %316 : vector<1x16x128xf32>
      %c123_i32_69 = arith.constant 123 : i32
      %318 = tpu.dynamic_rotate %293 by %c123_i32_69 dim 2 : vector<1x16x128xf32>, i32 -> vector<1x16x128xf32>
      %c54 = arith.constant 54 : index
      %319 = memref.load %arg2[%c54] : memref<98xf32, #tpu.memory_space<smem>>
      %320 = vector.broadcast %319 : f32 to vector<1x16x128xf32>
      %321 = arith.mulf %320, %318 : vector<1x16x128xf32>
      %322 = arith.addf %317, %321 : vector<1x16x128xf32>
      %c122_i32_70 = arith.constant 122 : i32
      %323 = tpu.dynamic_rotate %293 by %c122_i32_70 dim 2 : vector<1x16x128xf32>, i32 -> vector<1x16x128xf32>
      %c55 = arith.constant 55 : index
      %324 = memref.load %arg2[%c55] : memref<98xf32, #tpu.memory_space<smem>>
      %325 = vector.broadcast %324 : f32 to vector<1x16x128xf32>
      %326 = arith.mulf %325, %323 : vector<1x16x128xf32>
      %327 = arith.addf %322, %326 : vector<1x16x128xf32>
      %328 = vector.extract_strided_slice %292 {offsets = [0, 1, 0], sizes = [1, 16, 128], strides = [1, 1, 1]} : vector<1x22x128xf32> to vector<1x16x128xf32>
      %c56 = arith.constant 56 : index
      %329 = memref.load %arg2[%c56] : memref<98xf32, #tpu.memory_space<smem>>
      %330 = vector.broadcast %329 : f32 to vector<1x16x128xf32>
      %331 = arith.mulf %330, %328 : vector<1x16x128xf32>
      %332 = arith.addf %327, %331 : vector<1x16x128xf32>
      %c127_i32_71 = arith.constant 127 : i32
      %333 = tpu.dynamic_rotate %328 by %c127_i32_71 dim 2 : vector<1x16x128xf32>, i32 -> vector<1x16x128xf32>
      %c57 = arith.constant 57 : index
      %334 = memref.load %arg2[%c57] : memref<98xf32, #tpu.memory_space<smem>>
      %335 = vector.broadcast %334 : f32 to vector<1x16x128xf32>
      %336 = arith.mulf %335, %333 : vector<1x16x128xf32>
      %337 = arith.addf %332, %336 : vector<1x16x128xf32>
      %c126_i32_72 = arith.constant 126 : i32
      %338 = tpu.dynamic_rotate %328 by %c126_i32_72 dim 2 : vector<1x16x128xf32>, i32 -> vector<1x16x128xf32>
      %c58 = arith.constant 58 : index
      %339 = memref.load %arg2[%c58] : memref<98xf32, #tpu.memory_space<smem>>
      %340 = vector.broadcast %339 : f32 to vector<1x16x128xf32>
      %341 = arith.mulf %340, %338 : vector<1x16x128xf32>
      %342 = arith.addf %337, %341 : vector<1x16x128xf32>
      %c125_i32_73 = arith.constant 125 : i32
      %343 = tpu.dynamic_rotate %328 by %c125_i32_73 dim 2 : vector<1x16x128xf32>, i32 -> vector<1x16x128xf32>
      %c59 = arith.constant 59 : index
      %344 = memref.load %arg2[%c59] : memref<98xf32, #tpu.memory_space<smem>>
      %345 = vector.broadcast %344 : f32 to vector<1x16x128xf32>
      %346 = arith.mulf %345, %343 : vector<1x16x128xf32>
      %347 = arith.addf %342, %346 : vector<1x16x128xf32>
      %c124_i32_74 = arith.constant 124 : i32
      %348 = tpu.dynamic_rotate %328 by %c124_i32_74 dim 2 : vector<1x16x128xf32>, i32 -> vector<1x16x128xf32>
      %c60 = arith.constant 60 : index
      %349 = memref.load %arg2[%c60] : memref<98xf32, #tpu.memory_space<smem>>
      %350 = vector.broadcast %349 : f32 to vector<1x16x128xf32>
      %351 = arith.mulf %350, %348 : vector<1x16x128xf32>
      %352 = arith.addf %347, %351 : vector<1x16x128xf32>
      %c123_i32_75 = arith.constant 123 : i32
      %353 = tpu.dynamic_rotate %328 by %c123_i32_75 dim 2 : vector<1x16x128xf32>, i32 -> vector<1x16x128xf32>
      %c61 = arith.constant 61 : index
      %354 = memref.load %arg2[%c61] : memref<98xf32, #tpu.memory_space<smem>>
      %355 = vector.broadcast %354 : f32 to vector<1x16x128xf32>
      %356 = arith.mulf %355, %353 : vector<1x16x128xf32>
      %357 = arith.addf %352, %356 : vector<1x16x128xf32>
      %c122_i32_76 = arith.constant 122 : i32
      %358 = tpu.dynamic_rotate %328 by %c122_i32_76 dim 2 : vector<1x16x128xf32>, i32 -> vector<1x16x128xf32>
      %c62 = arith.constant 62 : index
      %359 = memref.load %arg2[%c62] : memref<98xf32, #tpu.memory_space<smem>>
      %360 = vector.broadcast %359 : f32 to vector<1x16x128xf32>
      %361 = arith.mulf %360, %358 : vector<1x16x128xf32>
      %362 = arith.addf %357, %361 : vector<1x16x128xf32>
      %363 = vector.extract_strided_slice %292 {offsets = [0, 2, 0], sizes = [1, 16, 128], strides = [1, 1, 1]} : vector<1x22x128xf32> to vector<1x16x128xf32>
      %c63 = arith.constant 63 : index
      %364 = memref.load %arg2[%c63] : memref<98xf32, #tpu.memory_space<smem>>
      %365 = vector.broadcast %364 : f32 to vector<1x16x128xf32>
      %366 = arith.mulf %365, %363 : vector<1x16x128xf32>
      %367 = arith.addf %362, %366 : vector<1x16x128xf32>
      %c127_i32_77 = arith.constant 127 : i32
      %368 = tpu.dynamic_rotate %363 by %c127_i32_77 dim 2 : vector<1x16x128xf32>, i32 -> vector<1x16x128xf32>
      %c64 = arith.constant 64 : index
      %369 = memref.load %arg2[%c64] : memref<98xf32, #tpu.memory_space<smem>>
      %370 = vector.broadcast %369 : f32 to vector<1x16x128xf32>
      %371 = arith.mulf %370, %368 : vector<1x16x128xf32>
      %372 = arith.addf %367, %371 : vector<1x16x128xf32>
      %c126_i32_78 = arith.constant 126 : i32
      %373 = tpu.dynamic_rotate %363 by %c126_i32_78 dim 2 : vector<1x16x128xf32>, i32 -> vector<1x16x128xf32>
      %c65 = arith.constant 65 : index
      %374 = memref.load %arg2[%c65] : memref<98xf32, #tpu.memory_space<smem>>
      %375 = vector.broadcast %374 : f32 to vector<1x16x128xf32>
      %376 = arith.mulf %375, %373 : vector<1x16x128xf32>
      %377 = arith.addf %372, %376 : vector<1x16x128xf32>
      %c125_i32_79 = arith.constant 125 : i32
      %378 = tpu.dynamic_rotate %363 by %c125_i32_79 dim 2 : vector<1x16x128xf32>, i32 -> vector<1x16x128xf32>
      %c66 = arith.constant 66 : index
      %379 = memref.load %arg2[%c66] : memref<98xf32, #tpu.memory_space<smem>>
      %380 = vector.broadcast %379 : f32 to vector<1x16x128xf32>
      %381 = arith.mulf %380, %378 : vector<1x16x128xf32>
      %382 = arith.addf %377, %381 : vector<1x16x128xf32>
      %c124_i32_80 = arith.constant 124 : i32
      %383 = tpu.dynamic_rotate %363 by %c124_i32_80 dim 2 : vector<1x16x128xf32>, i32 -> vector<1x16x128xf32>
      %c67 = arith.constant 67 : index
      %384 = memref.load %arg2[%c67] : memref<98xf32, #tpu.memory_space<smem>>
      %385 = vector.broadcast %384 : f32 to vector<1x16x128xf32>
      %386 = arith.mulf %385, %383 : vector<1x16x128xf32>
      %387 = arith.addf %382, %386 : vector<1x16x128xf32>
      %c123_i32_81 = arith.constant 123 : i32
      %388 = tpu.dynamic_rotate %363 by %c123_i32_81 dim 2 : vector<1x16x128xf32>, i32 -> vector<1x16x128xf32>
      %c68 = arith.constant 68 : index
      %389 = memref.load %arg2[%c68] : memref<98xf32, #tpu.memory_space<smem>>
      %390 = vector.broadcast %389 : f32 to vector<1x16x128xf32>
      %391 = arith.mulf %390, %388 : vector<1x16x128xf32>
      %392 = arith.addf %387, %391 : vector<1x16x128xf32>
      %c122_i32_82 = arith.constant 122 : i32
      %393 = tpu.dynamic_rotate %363 by %c122_i32_82 dim 2 : vector<1x16x128xf32>, i32 -> vector<1x16x128xf32>
      %c69 = arith.constant 69 : index
      %394 = memref.load %arg2[%c69] : memref<98xf32, #tpu.memory_space<smem>>
      %395 = vector.broadcast %394 : f32 to vector<1x16x128xf32>
      %396 = arith.mulf %395, %393 : vector<1x16x128xf32>
      %397 = arith.addf %392, %396 : vector<1x16x128xf32>
      %398 = vector.extract_strided_slice %292 {offsets = [0, 3, 0], sizes = [1, 16, 128], strides = [1, 1, 1]} : vector<1x22x128xf32> to vector<1x16x128xf32>
      %c70 = arith.constant 70 : index
      %399 = memref.load %arg2[%c70] : memref<98xf32, #tpu.memory_space<smem>>
      %400 = vector.broadcast %399 : f32 to vector<1x16x128xf32>
      %401 = arith.mulf %400, %398 : vector<1x16x128xf32>
      %402 = arith.addf %397, %401 : vector<1x16x128xf32>
      %c127_i32_83 = arith.constant 127 : i32
      %403 = tpu.dynamic_rotate %398 by %c127_i32_83 dim 2 : vector<1x16x128xf32>, i32 -> vector<1x16x128xf32>
      %c71 = arith.constant 71 : index
      %404 = memref.load %arg2[%c71] : memref<98xf32, #tpu.memory_space<smem>>
      %405 = vector.broadcast %404 : f32 to vector<1x16x128xf32>
      %406 = arith.mulf %405, %403 : vector<1x16x128xf32>
      %407 = arith.addf %402, %406 : vector<1x16x128xf32>
      %c126_i32_84 = arith.constant 126 : i32
      %408 = tpu.dynamic_rotate %398 by %c126_i32_84 dim 2 : vector<1x16x128xf32>, i32 -> vector<1x16x128xf32>
      %c72 = arith.constant 72 : index
      %409 = memref.load %arg2[%c72] : memref<98xf32, #tpu.memory_space<smem>>
      %410 = vector.broadcast %409 : f32 to vector<1x16x128xf32>
      %411 = arith.mulf %410, %408 : vector<1x16x128xf32>
      %412 = arith.addf %407, %411 : vector<1x16x128xf32>
      %c125_i32_85 = arith.constant 125 : i32
      %413 = tpu.dynamic_rotate %398 by %c125_i32_85 dim 2 : vector<1x16x128xf32>, i32 -> vector<1x16x128xf32>
      %c73 = arith.constant 73 : index
      %414 = memref.load %arg2[%c73] : memref<98xf32, #tpu.memory_space<smem>>
      %415 = vector.broadcast %414 : f32 to vector<1x16x128xf32>
      %416 = arith.mulf %415, %413 : vector<1x16x128xf32>
      %417 = arith.addf %412, %416 : vector<1x16x128xf32>
      %c124_i32_86 = arith.constant 124 : i32
      %418 = tpu.dynamic_rotate %398 by %c124_i32_86 dim 2 : vector<1x16x128xf32>, i32 -> vector<1x16x128xf32>
      %c74 = arith.constant 74 : index
      %419 = memref.load %arg2[%c74] : memref<98xf32, #tpu.memory_space<smem>>
      %420 = vector.broadcast %419 : f32 to vector<1x16x128xf32>
      %421 = arith.mulf %420, %418 : vector<1x16x128xf32>
      %422 = arith.addf %417, %421 : vector<1x16x128xf32>
      %c123_i32_87 = arith.constant 123 : i32
      %423 = tpu.dynamic_rotate %398 by %c123_i32_87 dim 2 : vector<1x16x128xf32>, i32 -> vector<1x16x128xf32>
      %c75 = arith.constant 75 : index
      %424 = memref.load %arg2[%c75] : memref<98xf32, #tpu.memory_space<smem>>
      %425 = vector.broadcast %424 : f32 to vector<1x16x128xf32>
      %426 = arith.mulf %425, %423 : vector<1x16x128xf32>
      %427 = arith.addf %422, %426 : vector<1x16x128xf32>
      %c122_i32_88 = arith.constant 122 : i32
      %428 = tpu.dynamic_rotate %398 by %c122_i32_88 dim 2 : vector<1x16x128xf32>, i32 -> vector<1x16x128xf32>
      %c76 = arith.constant 76 : index
      %429 = memref.load %arg2[%c76] : memref<98xf32, #tpu.memory_space<smem>>
      %430 = vector.broadcast %429 : f32 to vector<1x16x128xf32>
      %431 = arith.mulf %430, %428 : vector<1x16x128xf32>
      %432 = arith.addf %427, %431 : vector<1x16x128xf32>
      %433 = vector.extract_strided_slice %292 {offsets = [0, 4, 0], sizes = [1, 16, 128], strides = [1, 1, 1]} : vector<1x22x128xf32> to vector<1x16x128xf32>
      %c77 = arith.constant 77 : index
      %434 = memref.load %arg2[%c77] : memref<98xf32, #tpu.memory_space<smem>>
      %435 = vector.broadcast %434 : f32 to vector<1x16x128xf32>
      %436 = arith.mulf %435, %433 : vector<1x16x128xf32>
      %437 = arith.addf %432, %436 : vector<1x16x128xf32>
      %c127_i32_89 = arith.constant 127 : i32
      %438 = tpu.dynamic_rotate %433 by %c127_i32_89 dim 2 : vector<1x16x128xf32>, i32 -> vector<1x16x128xf32>
      %c78 = arith.constant 78 : index
      %439 = memref.load %arg2[%c78] : memref<98xf32, #tpu.memory_space<smem>>
      %440 = vector.broadcast %439 : f32 to vector<1x16x128xf32>
      %441 = arith.mulf %440, %438 : vector<1x16x128xf32>
      %442 = arith.addf %437, %441 : vector<1x16x128xf32>
      %c126_i32_90 = arith.constant 126 : i32
      %443 = tpu.dynamic_rotate %433 by %c126_i32_90 dim 2 : vector<1x16x128xf32>, i32 -> vector<1x16x128xf32>
      %c79 = arith.constant 79 : index
      %444 = memref.load %arg2[%c79] : memref<98xf32, #tpu.memory_space<smem>>
      %445 = vector.broadcast %444 : f32 to vector<1x16x128xf32>
      %446 = arith.mulf %445, %443 : vector<1x16x128xf32>
      %447 = arith.addf %442, %446 : vector<1x16x128xf32>
      %c125_i32_91 = arith.constant 125 : i32
      %448 = tpu.dynamic_rotate %433 by %c125_i32_91 dim 2 : vector<1x16x128xf32>, i32 -> vector<1x16x128xf32>
      %c80 = arith.constant 80 : index
      %449 = memref.load %arg2[%c80] : memref<98xf32, #tpu.memory_space<smem>>
      %450 = vector.broadcast %449 : f32 to vector<1x16x128xf32>
      %451 = arith.mulf %450, %448 : vector<1x16x128xf32>
      %452 = arith.addf %447, %451 : vector<1x16x128xf32>
      %c124_i32_92 = arith.constant 124 : i32
      %453 = tpu.dynamic_rotate %433 by %c124_i32_92 dim 2 : vector<1x16x128xf32>, i32 -> vector<1x16x128xf32>
      %c81 = arith.constant 81 : index
      %454 = memref.load %arg2[%c81] : memref<98xf32, #tpu.memory_space<smem>>
      %455 = vector.broadcast %454 : f32 to vector<1x16x128xf32>
      %456 = arith.mulf %455, %453 : vector<1x16x128xf32>
      %457 = arith.addf %452, %456 : vector<1x16x128xf32>
      %c123_i32_93 = arith.constant 123 : i32
      %458 = tpu.dynamic_rotate %433 by %c123_i32_93 dim 2 : vector<1x16x128xf32>, i32 -> vector<1x16x128xf32>
      %c82 = arith.constant 82 : index
      %459 = memref.load %arg2[%c82] : memref<98xf32, #tpu.memory_space<smem>>
      %460 = vector.broadcast %459 : f32 to vector<1x16x128xf32>
      %461 = arith.mulf %460, %458 : vector<1x16x128xf32>
      %462 = arith.addf %457, %461 : vector<1x16x128xf32>
      %c122_i32_94 = arith.constant 122 : i32
      %463 = tpu.dynamic_rotate %433 by %c122_i32_94 dim 2 : vector<1x16x128xf32>, i32 -> vector<1x16x128xf32>
      %c83 = arith.constant 83 : index
      %464 = memref.load %arg2[%c83] : memref<98xf32, #tpu.memory_space<smem>>
      %465 = vector.broadcast %464 : f32 to vector<1x16x128xf32>
      %466 = arith.mulf %465, %463 : vector<1x16x128xf32>
      %467 = arith.addf %462, %466 : vector<1x16x128xf32>
      %468 = vector.extract_strided_slice %292 {offsets = [0, 5, 0], sizes = [1, 16, 128], strides = [1, 1, 1]} : vector<1x22x128xf32> to vector<1x16x128xf32>
      %c84 = arith.constant 84 : index
      %469 = memref.load %arg2[%c84] : memref<98xf32, #tpu.memory_space<smem>>
      %470 = vector.broadcast %469 : f32 to vector<1x16x128xf32>
      %471 = arith.mulf %470, %468 : vector<1x16x128xf32>
      %472 = arith.addf %467, %471 : vector<1x16x128xf32>
      %c127_i32_95 = arith.constant 127 : i32
      %473 = tpu.dynamic_rotate %468 by %c127_i32_95 dim 2 : vector<1x16x128xf32>, i32 -> vector<1x16x128xf32>
      %c85 = arith.constant 85 : index
      %474 = memref.load %arg2[%c85] : memref<98xf32, #tpu.memory_space<smem>>
      %475 = vector.broadcast %474 : f32 to vector<1x16x128xf32>
      %476 = arith.mulf %475, %473 : vector<1x16x128xf32>
      %477 = arith.addf %472, %476 : vector<1x16x128xf32>
      %c126_i32_96 = arith.constant 126 : i32
      %478 = tpu.dynamic_rotate %468 by %c126_i32_96 dim 2 : vector<1x16x128xf32>, i32 -> vector<1x16x128xf32>
      %c86 = arith.constant 86 : index
      %479 = memref.load %arg2[%c86] : memref<98xf32, #tpu.memory_space<smem>>
      %480 = vector.broadcast %479 : f32 to vector<1x16x128xf32>
      %481 = arith.mulf %480, %478 : vector<1x16x128xf32>
      %482 = arith.addf %477, %481 : vector<1x16x128xf32>
      %c125_i32_97 = arith.constant 125 : i32
      %483 = tpu.dynamic_rotate %468 by %c125_i32_97 dim 2 : vector<1x16x128xf32>, i32 -> vector<1x16x128xf32>
      %c87 = arith.constant 87 : index
      %484 = memref.load %arg2[%c87] : memref<98xf32, #tpu.memory_space<smem>>
      %485 = vector.broadcast %484 : f32 to vector<1x16x128xf32>
      %486 = arith.mulf %485, %483 : vector<1x16x128xf32>
      %487 = arith.addf %482, %486 : vector<1x16x128xf32>
      %c124_i32_98 = arith.constant 124 : i32
      %488 = tpu.dynamic_rotate %468 by %c124_i32_98 dim 2 : vector<1x16x128xf32>, i32 -> vector<1x16x128xf32>
      %c88 = arith.constant 88 : index
      %489 = memref.load %arg2[%c88] : memref<98xf32, #tpu.memory_space<smem>>
      %490 = vector.broadcast %489 : f32 to vector<1x16x128xf32>
      %491 = arith.mulf %490, %488 : vector<1x16x128xf32>
      %492 = arith.addf %487, %491 : vector<1x16x128xf32>
      %c123_i32_99 = arith.constant 123 : i32
      %493 = tpu.dynamic_rotate %468 by %c123_i32_99 dim 2 : vector<1x16x128xf32>, i32 -> vector<1x16x128xf32>
      %c89 = arith.constant 89 : index
      %494 = memref.load %arg2[%c89] : memref<98xf32, #tpu.memory_space<smem>>
      %495 = vector.broadcast %494 : f32 to vector<1x16x128xf32>
      %496 = arith.mulf %495, %493 : vector<1x16x128xf32>
      %497 = arith.addf %492, %496 : vector<1x16x128xf32>
      %c122_i32_100 = arith.constant 122 : i32
      %498 = tpu.dynamic_rotate %468 by %c122_i32_100 dim 2 : vector<1x16x128xf32>, i32 -> vector<1x16x128xf32>
      %c90 = arith.constant 90 : index
      %499 = memref.load %arg2[%c90] : memref<98xf32, #tpu.memory_space<smem>>
      %500 = vector.broadcast %499 : f32 to vector<1x16x128xf32>
      %501 = arith.mulf %500, %498 : vector<1x16x128xf32>
      %502 = arith.addf %497, %501 : vector<1x16x128xf32>
      %503 = vector.extract_strided_slice %292 {offsets = [0, 6, 0], sizes = [1, 16, 128], strides = [1, 1, 1]} : vector<1x22x128xf32> to vector<1x16x128xf32>
      %c91 = arith.constant 91 : index
      %504 = memref.load %arg2[%c91] : memref<98xf32, #tpu.memory_space<smem>>
      %505 = vector.broadcast %504 : f32 to vector<1x16x128xf32>
      %506 = arith.mulf %505, %503 : vector<1x16x128xf32>
      %507 = arith.addf %502, %506 : vector<1x16x128xf32>
      %c127_i32_101 = arith.constant 127 : i32
      %508 = tpu.dynamic_rotate %503 by %c127_i32_101 dim 2 : vector<1x16x128xf32>, i32 -> vector<1x16x128xf32>
      %c92 = arith.constant 92 : index
      %509 = memref.load %arg2[%c92] : memref<98xf32, #tpu.memory_space<smem>>
      %510 = vector.broadcast %509 : f32 to vector<1x16x128xf32>
      %511 = arith.mulf %510, %508 : vector<1x16x128xf32>
      %512 = arith.addf %507, %511 : vector<1x16x128xf32>
      %c126_i32_102 = arith.constant 126 : i32
      %513 = tpu.dynamic_rotate %503 by %c126_i32_102 dim 2 : vector<1x16x128xf32>, i32 -> vector<1x16x128xf32>
      %c93 = arith.constant 93 : index
      %514 = memref.load %arg2[%c93] : memref<98xf32, #tpu.memory_space<smem>>
      %515 = vector.broadcast %514 : f32 to vector<1x16x128xf32>
      %516 = arith.mulf %515, %513 : vector<1x16x128xf32>
      %517 = arith.addf %512, %516 : vector<1x16x128xf32>
      %c125_i32_103 = arith.constant 125 : i32
      %518 = tpu.dynamic_rotate %503 by %c125_i32_103 dim 2 : vector<1x16x128xf32>, i32 -> vector<1x16x128xf32>
      %c94 = arith.constant 94 : index
      %519 = memref.load %arg2[%c94] : memref<98xf32, #tpu.memory_space<smem>>
      %520 = vector.broadcast %519 : f32 to vector<1x16x128xf32>
      %521 = arith.mulf %520, %518 : vector<1x16x128xf32>
      %522 = arith.addf %517, %521 : vector<1x16x128xf32>
      %c124_i32_104 = arith.constant 124 : i32
      %523 = tpu.dynamic_rotate %503 by %c124_i32_104 dim 2 : vector<1x16x128xf32>, i32 -> vector<1x16x128xf32>
      %c95 = arith.constant 95 : index
      %524 = memref.load %arg2[%c95] : memref<98xf32, #tpu.memory_space<smem>>
      %525 = vector.broadcast %524 : f32 to vector<1x16x128xf32>
      %526 = arith.mulf %525, %523 : vector<1x16x128xf32>
      %527 = arith.addf %522, %526 : vector<1x16x128xf32>
      %c123_i32_105 = arith.constant 123 : i32
      %528 = tpu.dynamic_rotate %503 by %c123_i32_105 dim 2 : vector<1x16x128xf32>, i32 -> vector<1x16x128xf32>
      %c96 = arith.constant 96 : index
      %529 = memref.load %arg2[%c96] : memref<98xf32, #tpu.memory_space<smem>>
      %530 = vector.broadcast %529 : f32 to vector<1x16x128xf32>
      %531 = arith.mulf %530, %528 : vector<1x16x128xf32>
      %532 = arith.addf %527, %531 : vector<1x16x128xf32>
      %c122_i32_106 = arith.constant 122 : i32
      %533 = tpu.dynamic_rotate %503 by %c122_i32_106 dim 2 : vector<1x16x128xf32>, i32 -> vector<1x16x128xf32>
      %c97 = arith.constant 97 : index
      %534 = memref.load %arg2[%c97] : memref<98xf32, #tpu.memory_space<smem>>
      %535 = vector.broadcast %534 : f32 to vector<1x16x128xf32>
      %536 = arith.mulf %535, %533 : vector<1x16x128xf32>
      %537 = arith.addf %532, %536 : vector<1x16x128xf32>
      %538 = vector.extract_strided_slice %537 {offsets = [0, 0, 0], sizes = [1, 16, 16], strides = [1, 1, 1]} : vector<1x16x128xf32> to vector<1x16x16xf32>
      %c0_107 = arith.constant 0 : index
      %539 = memref.load %arg3[%c0_107] : memref<1xf32, #tpu.memory_space<smem>>
      %540 = vector.broadcast %539 : f32 to vector<1x16x16xf32>
      %541 = arith.addf %538, %540 : vector<1x16x16xf32>
      %542 = vector.shape_cast %541 : vector<1x16x16xf32> to vector<1x1x16x16xf32>
      %c0_108 = arith.constant 0 : index
      %c0_109 = arith.constant 0 : index
      %c0_110 = arith.constant 0 : index
      %c0_111 = arith.constant 0 : index
      %543 = vector.load %arg5[%c0_108, %c0_109, %c0_110, %c0_111] : memref<1x1x16x16xf32, #tpu.memory_space<vmem>>, vector<1x1x16x16xf32>
      tpu.vector_store %arg5[%c0_108, %c0_109, %c0_110, %c0_111], %542 {strides = array<i32>} : memref<1x1x16x16xf32, #tpu.memory_space<vmem>>, vector<1x1x16x16xf32>,
    } else {
    }
    return
  }
  func.func @transform_0(%arg0: i32, %arg1: i32, %arg2: memref<98xf32, #tpu.memory_space<smem>>, %arg3: memref<1xf32, #tpu.memory_space<smem>>) -> (i32, i32, i32, i32) {
    %c0_i32 = arith.constant 0 : i32
    %c0_i32_0 = arith.constant 0 : i32
    %c0_i32_1 = arith.constant 0 : i32
    return %arg0, %arg1, %c0_i32, %c0_i32_0 : i32, i32, i32, i32
  }
  func.func @transform_1(%arg0: i32, %arg1: i32, %arg2: memref<98xf32, #tpu.memory_space<smem>>, %arg3: memref<1xf32, #tpu.memory_space<smem>>) -> (i32, i32, i32, i32) {
    %c0_i32 = arith.constant 0 : i32
    %c0_i32_0 = arith.constant 0 : i32
    %c0_i32_1 = arith.constant 0 : i32
    %c0_i32_2 = arith.constant 0 : i32
    return %arg0, %c0_i32, %c0_i32_0, %c0_i32_1 : i32, i32, i32, i32
  }
}

</mosaic_0001>

<llo_original>
// kernel: tpu_custom_call.1
$region0: #{tpu_custom_call.1}
  #allocation0 [shape = 'u32[]', space=smem, size = 0x4, offset = 0x4, fixed_abs, tag = 'smem constant byte address 0x4 - core index']
  #allocation1 [shape = 'u32[144,128]{1,0:T(1,128)}', space=vmem, size = 0x12000, scoped, tag = 'internal scratch']
  #allocation2 [shape = 'f32[1,16,16]{2,1,0:T(8,128)}', space=vmem, size = 0x2000, scoped, tag = 'scratch operand']
  #allocation3 [shape = 'f32[1,16,16]{2,1,0:T(8,128)}', space=vmem, size = 0x2000, scoped, tag = 'scratch operand']
  #allocation4 [shape = 's32[1]{0}', space=sflag, size = 0x4, scoped, tag = 'scoped memory for tpu_custom_call.1']
  #allocation5 [shape = 'u8[512]{0}', space=smem, size = 0x200, scoped, tag = 'prefetched SMEM operand 0']
  #allocation6 [shape = 'f32[1]{0:T(128)S(6)}', space=smem, size = 0x200, scoped, tag = 'prefetched SMEM operand 1']
  %s0 = inlined_call_operand.vmem [shape: f32[98], index: 0, kind: input, shape index: {}]
  %s1 = inlined_call_operand.<no memory space> [shape: f32[1], index: 1, kind: input, shape index: {}]
  %s2 = inlined_call_operand.hbm [shape: f32[2,4,16,16], index: 2, kind: input, shape index: {}]
  %s3 = inlined_call_operand.hbm [shape: f32[2,1,16,16], index: 3, kind: output, shape index: {}]
  %s4 = sld [smem:[#allocation0]]
  $region49: #{tpu_custom_call.1} parent=0
    _
  %s6 = ssub.s32 1, %s4
  %s7 = scalar_select 0, %s6, %s4
  %s8 = sshll.u32 %s0, 4
  %s9 = int_to_ptr.vmem [resolvable:$true] %s8
  %11 = dma.vmem_to_smem %s9, 16, [#allocation5], [#allocation4]
  %12 = sst [smem:[#allocation6]] %s1
  %13 = dma.done [#allocation4], 16
  %14 = sfence
  $region1: #{tpu_custom_call.1} parent=0
    #allocation7 [shape = 'u8[65536]{0}', space=vmem, size = 0x10000, scoped, tag = 'input window, operand 2']
    #allocation8 [shape = 's32[2]{0}', space=sflag, size = 0x8, scoped, tag = 'scoped memory for tpu_custom_call.1']
    #allocation9 [shape = 's32[2]{0}', space=sflag, size = 0x8, scoped, tag = 'scoped memory for tpu_custom_call.1']
    #allocation10 [shape = 'u8[16384]{0}', space=vmem, size = 0x4000, scoped, tag = 'output window, operand 0']
    %15 = vsyncpa [#allocation8], 0
    %s16 = scalar_lea.sflag [#allocation8], 1
    %17 = vsyncpa %s16, 0
    %18 = vsyncpa [#allocation9], 0
    %s19 = scalar_lea.sflag [#allocation9], 1
    %20 = vsyncpa %s19, 0
    loop: start=0, step=1, limit=4
    $region2: #{tpu_custom_call.1} parent=1 // loop_pre_header
      _
    $region3: #{tpu_custom_call.1} parent=1 // loop_header
      %s22 = sphi 0, %s26
      %p23 = scmp.ge.s32.totalorder %s22, 4
      %s29 = sphi 0, %s41
      %s30 = sphi 0, %s37
      %s31 = sphi 0, %s29
      %s32 = sphi 0, %s30
      %s33 = sphi 0, %s31
      %s34 = sphi 0, %s32
      %s46 = sphi 0, %s48
      %s49 = sphi 0, %s46
      %s50 = sphi 0, %s49
      %s66 = sphi 0, %s50
      %s72 = sphi 0, %s74
      %s75 = sphi 0, %s72
      %s76 = sphi 0, %s75
      %s92 = sphi 0, %s76
    $region4: #{tpu_custom_call.1} parent=1 // loop_header_branch
      %25 = sbr.rel (%p23) target = $region8
    $region5: #{tpu_custom_call.1} parent=1 // loop_body
      %s27 = ssub.s32 %s22, 1
      %s28 = ssub.s32 %s22, 2
      %s35 = sadd.s32 1, %s30
      %p36 = scmp.ge.s32.totalorder %s35, 1
      %s37 = scalar_select %p36, 0, %s35
      %s38 = sadd.s32 1, %s29
      %s39 = scalar_select %p36, %s38, %s29
      %p40 = scmp.ge.s32.totalorder %s39, 2
      %s41 = scalar_select %p40, 0, %s39
      %s42 = ssub.s32 %s29, %s41
      %s43 = ssub.s32 %s30, %s37
      %s44 = sor.u32 %s42, %s43
      %p45 = scmp.eq.s32.totalorder %s44, 0
      %s47 = sadd.s32 %s46, 1
      %s48 = scalar_select %p45, %s46, %s47
      %p51 = pneg %p45
      %p52 = scmp.eq.s32.totalorder %s22, 1
      %p53 = por %p51, %p52
      %p54 = scmp.ne.s32.totalorder %s46, %s49
      %p55 = scmp.eq.s32.totalorder %s22, 0
      %p56 = por %p54, %p55
      %p57 = scmp.ne.s32.totalorder %s46, %s49
      %p58 = scmp.eq.s32.totalorder %s27, 1
      %p59 = por %p57, %p58
      %p60 = scmp.ne.s32.totalorder %s49, %s50
      %p61 = scmp.eq.s32.totalorder %s27, 0
      %p62 = por %p60, %p61
      %p63 = scmp.ne.s32.totalorder %s49, %s50
      %p64 = scmp.eq.s32.totalorder %s28, 1
      %p65 = por %p63, %p64
      %p67 = scmp.ne.s32.totalorder %s50, %s66
      %p68 = scmp.eq.s32.totalorder %s28, 0
      %p69 = por %p67, %p68
      %s70 = ssub.s32 %s29, %s41
      %p71 = scmp.eq.s32.totalorder %s70, 0
      %s73 = sadd.s32 %s72, 1
      %s74 = scalar_select %p71, %s72, %s73
      %p77 = pneg %p71
      %p78 = scmp.eq.s32.totalorder %s22, 1
      %p79 = por %p77, %p78
      %p80 = scmp.ne.s32.totalorder %s72, %s75
      %p81 = scmp.eq.s32.totalorder %s22, 0
      %p82 = por %p80, %p81
      %p83 = scmp.ne.s32.totalorder %s72, %s75
      %p84 = scmp.eq.s32.totalorder %s27, 1
      %p85 = por %p83, %p84
      %p86 = scmp.ne.s32.totalorder %s75, %s76
      %p87 = scmp.eq.s32.totalorder %s27, 0
      %p88 = por %p86, %p87
      %p89 = scmp.ne.s32.totalorder %s75, %s76
      %p90 = scmp.eq.s32.totalorder %s28, 1
      %p91 = por %p89, %p90
      %p93 = scmp.ne.s32.totalorder %s76, %s92
      %p94 = scmp.eq.s32.totalorder %s28, 0
      %p95 = por %p93, %p94
      %p96 = scmp.le.s32.totalorder 1, %s22
      %p97 = scmp.lt.s32.totalorder %s22, 3
      %p98 = pnand %p96, %p97
      %p99 = pneg %p98
      // Predicated region
      $region9: #{tpu_custom_call.1} parent=5 // pred_check
        _
      $region10: #{tpu_custom_call.1} parent=5 // pred_check_branch
        %101 = sbr.rel (%p98) target = $region12
      $region11: #{tpu_custom_call.1} parent=5 // pred_region
        %s102 = ssub.s32 %s22, 1
      $region12: #{tpu_custom_call.1} parent=5 // pred_fallthru
        _
      %p103 = scmp.lt.s32.totalorder %s22, 2
      // Predicated region
      $region13: #{tpu_custom_call.1} parent=5 // pred_check
        %p104 = pneg %p103
      $region14: #{tpu_custom_call.1} parent=5 // pred_check_branch
        %106 = sbr.rel (%p104) target = $region16
      $region15: #{tpu_custom_call.1} parent=5 // pred_region
        // Predicated region
        $region17: #{tpu_custom_call.1} parent=15 // pred_check
          %p107 = pneg %p56
        $region18: #{tpu_custom_call.1} parent=15 // pred_check_branch
          %109 = sbr.rel (%p107) target = $region20
        $region19: #{tpu_custom_call.1} parent=15 // pred_region
          %s110 = sand.u32 %s46, 1
          %s111 = scalar_lea.sflag [#allocation8], %s110
          %s112 = sand.u32 %s46, 1
          %s113 = smul.addr %s112, 64
          %s114 = scalar_lea.vmem [#allocation7], %s113
          %s115 = smul.u32 4, %s30
          %s117 = ssub.s32 1024, 1024
          %118 = vsyncadd %s111, %s117
          %s119 = smul.addr %s115, 2
          %s120 = smul.addr %s29, 8
          %s121 = sadd.s32 %s119, %s120
          %s122 = smul.addr %s121, 128
          %s123 = scalar_lea.hbm %s2, %s122
          %s124 = sshll.u32 %s114, 4
          %s125 = int_to_ptr.vmem [resolvable:$true] %s124
          %130 = dma.hbm_to_vmem [thread:$0]  %s123, 1024, %s125, %s111, 128, 128, 8
        $region20: #{tpu_custom_call.1} parent=15 // pred_fallthru
          _
      $region16: #{tpu_custom_call.1} parent=5 // pred_fallthru
        _
      %p131 = scmp.le.s32.totalorder 1, %s22
      %p132 = scmp.lt.s32.totalorder %s22, 3
      %p133 = pnand %p131, %p132
      %p134 = pneg %p133
      // Predicated region
      $region21: #{tpu_custom_call.1} parent=5 // pred_check
        _
      $region22: #{tpu_custom_call.1} parent=5 // pred_check_branch
        %136 = sbr.rel (%p133) target = $region24
      $region23: #{tpu_custom_call.1} parent=5 // pred_region
        %s137 = ssub.s32 %s22, 1
        %s138 = sand.u32 %s49, 1
        %s139 = scalar_lea.sflag [#allocation8], %s138
        %s140 = sand.u32 %s49, 1
        %s141 = smul.addr %s140, 64
        %s142 = scalar_lea.vmem [#allocation7], %s141
        // Predicated region
        $region25: #{tpu_custom_call.1} parent=23 // pred_check
          %p143 = pneg %p62
        $region26: #{tpu_custom_call.1} parent=23 // pred_check_branch
          %145 = sbr.rel (%p143) target = $region28
        $region27: #{tpu_custom_call.1} parent=23 // pred_region
          %146 = dma.done %s139, 1024
        $region28: #{tpu_custom_call.1} parent=23 // pred_fallthru
          _
        %s147 = sand.u32 %s49, 1
        %s148 = scalar_lea.sflag [#allocation8], %s147
        %s149 = sand.u32 %s49, 1
        %s150 = smul.addr %s149, 64
        %s151 = scalar_lea.vmem [#allocation7], %s150
        %p152 = pneg %p62
        %p153 = pneg %p59
        %p154 = pneg %p88
        %p155 = pneg %p85
        %s156 = sand.u32 %s75, 1
        %s157 = scalar_lea.sflag [#allocation9], %s156
        %s158 = sand.u32 %s75, 1
        %s159 = smul.addr %s158, 16
        %s160 = scalar_lea.vmem [#allocation10], %s159
        %s161 = smul.u32 4, %s32
        %v162 = vld [vmem:[%s142] sm:$0xff]
        %v163 = vld [vmem:[%s142 + $0x8] sm:$0xff]
        %v164 = vld [vmem:[%s142 + $0x10] sm:$0xff]
        %v165 = vld [vmem:[%s142 + $0x18] sm:$0xff]
        %v166 = vld [vmem:[%s142 + $0x20] sm:$0xff]
        %v167 = vld [vmem:[%s142 + $0x28] sm:$0xff]
        %v168 = vld [vmem:[%s142 + $0x30] sm:$0xff]
        %v169 = vld [vmem:[%s142 + $0x38] sm:$0xff]
        %p170 = scmp.eq.s32.totalorder %s32, 0
        // Predicated region
        $region29: #{tpu_custom_call.1} parent=23 // pred_check
          %p171 = pneg %p170
        $region30: #{tpu_custom_call.1} parent=23 // pred_check_branch
          %173 = sbr.rel (%p171) target = $region32
        $region31: #{tpu_custom_call.1} parent=23 // pred_region
          %vm174 = vcmask 130048
          %175 = vst.msk [vmem:[#allocation2] sm:$0xff] %vm174, 0.0
          %176 = vst.msk [vmem:[#allocation2 + $0x8] sm:$0xff] %vm174, 0.0
          %177 = vst.msk [vmem:[#allocation3] sm:$0xff] %vm174, -inf
          %178 = vst.msk [vmem:[#allocation3 + $0x8] sm:$0xff] %vm174, -inf
        $region32: #{tpu_custom_call.1} parent=23 // pred_fallthru
          _
        %v179 = vld [vmem:[#allocation2] sm:$0xff]
        %v180 = vld [vmem:[#allocation2 + $0x8] sm:$0xff]
        %vm181 = vcmask 130048
        %v182 = vsel %vm181, %v162, 0.0
        %v183 = vsel %vm181, %v164, 0.0
        %v184 = vadd.f32 %v182, %v183
        %v185 = vsel %vm181, %v166, 0.0
        %v186 = vadd.f32 %v184, %v185
        %v187 = vsel %vm181, %v168, 0.0
        %v188 = vadd.f32 %v186, %v187
        %v189 = vsel %vm181, %v163, 0.0
        %v190 = vsel %vm181, %v165, 0.0
        %v191 = vadd.f32 %v189, %v190
        %v192 = vsel %vm181, %v167, 0.0
        %v193 = vadd.f32 %v191, %v192
        %v194 = vsel %vm181, %v169, 0.0
        %v195 = vadd.f32 %v193, %v194
        %v196 = vadd.f32 %v179, %v188
        %v197 = vadd.f32 %v180, %v195
        %198 = vst.msk [vmem:[#allocation2] sm:$0xff] %vm181, %v196
        %199 = vst.msk [vmem:[#allocation2 + $0x8] sm:$0xff] %vm181, %v197
        %v200 = vld [vmem:[#allocation3] sm:$0xff]
        %v201 = vld [vmem:[#allocation3 + $0x8] sm:$0xff]
        %v202 = vsel %vm181, %v162, -inf
        %v203 = vsel %vm181, %v164, -inf
        %v204 = vsel %vm181, %v166, -inf
        %v205 = vmax.f32 %v202, %v204
        %v206 = vsel %vm181, %v168, -inf
        %v207 = vmax.f32 %v203, %v206
        %v208 = vmax.f32 %v205, %v207
        %v209 = vsel %vm181, %v163, -inf
        %v210 = vsel %vm181, %v165, -inf
        %v211 = vsel %vm181, %v167, -inf
        %v212 = vmax.f32 %v209, %v211
        %v213 = vsel %vm181, %v169, -inf
        %v214 = vmax.f32 %v210, %v213
        %v215 = vmax.f32 %v212, %v214
        %v216 = vmax.f32 %v200, %v208
        %v217 = vmax.f32 %v201, %v215
        %218 = vst.msk [vmem:[#allocation3] sm:$0xff] %vm181, %v216
        %219 = vst.msk [vmem:[#allocation3 + $0x8] sm:$0xff] %vm181, %v217
        // Predicated region
        $region33: #{tpu_custom_call.1} parent=23 // pred_check
          %p220 = pneg %p170
        $region34: #{tpu_custom_call.1} parent=23 // pred_check_branch
          %222 = sbr.rel (%p220) target = $region36
        $region35: #{tpu_custom_call.1} parent=23 // pred_region
          %v223 = vld [vmem:[#allocation2] sm:$0xff]
          %v224 = vld [vmem:[#allocation2 + $0x8] sm:$0xff]
          %v226 = vrot.slane %v223, 3
          %v228 = vrot.slane %v223, 1
          %v230 = vrot.slane %v223, 7
          %vm233 = vcmask 1042432
          %v234 = vrot.slane %v223, 5
          %v235 = vrot.slane %v224, 5
          %v236 = vsel %vm233, %v234, %v235
          %v239 = vrot.slane %v224, 3
          %v241 = vrot.slane %v224, 1
          %v243 = vrot.slane %v224, 7
          %vm245 = vcmask 1040384
          %v246 = vsel %vm245, %v226, %v228
          %vm247 = vcmask 1041408
          %v248 = vsel %vm247, %v246, %v230
          %v249 = vsel %vm233, %v248, %v234
          %v250 = vsel %vm233, %v235, %v239
          %vm251 = vcmask 1043456
          %v252 = vsel %vm251, %v250, %v241
          %vm253 = vcmask 1044480
          %v254 = vsel %vm253, %v252, %v243
          %257 = vrot.lane.b32.xlu0 %v249, 125
          %v258 = vpop.permute.xlu0 %257
          %259 = vrot.lane.b32.xlu0 %v236, 125
          %v260 = vpop.permute.xlu0 %259
          %261 = vrot.lane.b32.xlu0 %v254, 125
          %v262 = vpop.permute.xlu0 %261
          %266 = vrot.lane.b32.xlu0 %v249, 127
          %v267 = vpop.permute.xlu0 %266
          %268 = vrot.lane.b32.xlu0 %v236, 127
          %v269 = vpop.permute.xlu0 %268
          %270 = vrot.lane.b32.xlu0 %v254, 127
          %v271 = vpop.permute.xlu0 %270
          %275 = vrot.lane.b32.xlu0 %v249, 1
          %v276 = vpop.permute.xlu0 %275
          %277 = vrot.lane.b32.xlu0 %v236, 1
          %v278 = vpop.permute.xlu0 %277
          %279 = vrot.lane.b32.xlu0 %v254, 1
          %v280 = vpop.permute.xlu0 %279
          %284 = vrot.lane.b32.xlu0 %v249, 3
          %v285 = vpop.permute.xlu0 %284
          %286 = vrot.lane.b32.xlu0 %v236, 3
          %v287 = vpop.permute.xlu0 %286
          %288 = vrot.lane.b32.xlu0 %v254, 3
          %v289 = vpop.permute.xlu0 %288
          %293 = vrot.lane.b32.xlu0 %v249, 5
          %v294 = vpop.permute.xlu0 %293
          %295 = vrot.lane.b32.xlu0 %v236, 5
          %v296 = vpop.permute.xlu0 %295
          %297 = vrot.lane.b32.xlu0 %v254, 5
          %v298 = vpop.permute.xlu0 %297
          %302 = vrot.lane.b32.xlu0 %v249, 7
          %v303 = vpop.permute.xlu0 %302
          %304 = vrot.lane.b32.xlu0 %v236, 7
          %v305 = vpop.permute.xlu0 %304
          %306 = vrot.lane.b32.xlu0 %v254, 7
          %v307 = vpop.permute.xlu0 %306
          %311 = vrot.lane.b32.xlu0 %v249, 9
          %v312 = vpop.permute.xlu0 %311
          %313 = vrot.lane.b32.xlu0 %v236, 9
          %v314 = vpop.permute.xlu0 %313
          %315 = vrot.lane.b32.xlu0 %v254, 9
          %v316 = vpop.permute.xlu0 %315
          %vm320 = vcmask 7168
          %v321 = vsel %vm320, %v258, %v267
          %v322 = vsel %vm320, %v260, %v269
          %v323 = vsel %vm320, %v262, %v271
          %vm324 = vcmask 15360
          %v325 = vsel %vm324, %v321, %v276
          %v326 = vsel %vm324, %v322, %v278
          %v327 = vsel %vm324, %v323, %v280
          %vm328 = vcmask 23552
          %v329 = vsel %vm328, %v325, %v285
          %v330 = vsel %vm328, %v326, %v287
          %v331 = vsel %vm328, %v327, %v289
          %vm332 = vcmask 154624
          %v333 = vsel %vm332, %v329, %v294
          %v334 = vsel %vm332, %v330, %v296
          %v335 = vsel %vm332, %v331, %v298
          %vm336 = vcmask 162816
          %v337 = vsel %vm336, %v333, %v303
          %v338 = vsel %vm336, %v334, %v305
          %v339 = vsel %vm336, %v335, %v307
          %vm340 = vcmask 171008
          %v341 = vsel %vm340, %v337, %v312
          %v342 = vsel %vm340, %v338, %v314
          %v343 = vsel %vm340, %v339, %v316
          %vm344 = vcmask 179200
          %v345 = vsel %vm344, %v341, 0.0
          %v346 = vsel %vm344, %v342, 0.0
          %v347 = vsel %vm344, %v343, 0.0
          %s348 = sld [smem:[#allocation5]]
          %v349 = vstv %s348
          %v350 = vmul.f32 %v349, %v345
          %v351 = vmul.f32 %v349, %v346
          %v352 = vadd.f32 %v350, 0.0
          %v353 = vadd.f32 %v351, 0.0
          %354 = vrot.lane.b32.xlu0 %v345, 127
          %v355 = vpop.permute.xlu0 %354
          %356 = vrot.lane.b32.xlu0 %v346, 127
          %v357 = vpop.permute.xlu0 %356
          %s358 = sld [smem:[#allocation5 + $0x1]]
          %v359 = vstv %s358
          %v360 = vmul.f32 %v359, %v355
          %v361 = vmul.f32 %v359, %v357
          %v362 = vadd.f32 %v352, %v360
          %v363 = vadd.f32 %v353, %v361
          %364 = vrot.lane.b32.xlu0 %v345, 126
          %v365 = vpop.permute.xlu0 %364
          %366 = vrot.lane.b32.xlu0 %v346, 126
          %v367 = vpop.permute.xlu0 %366
          %s368 = sld [smem:[#allocation5 + $0x2]]
          %v369 = vstv %s368
          %v370 = vmul.f32 %v369, %v365
          %v371 = vmul.f32 %v369, %v367
          %v372 = vadd.f32 %v362, %v370
          %v373 = vadd.f32 %v363, %v371
          %374 = vrot.lane.b32.xlu0 %v345, 125
          %v375 = vpop.permute.xlu0 %374
          %376 = vrot.lane.b32.xlu0 %v346, 125
          %v377 = vpop.permute.xlu0 %376
          %s378 = sld [smem:[#allocation5 + $0x3]]
          %v379 = vstv %s378
          %v380 = vmul.f32 %v379, %v375
          %v381 = vmul.f32 %v379, %v377
          %v382 = vadd.f32 %v372, %v380
          %v383 = vadd.f32 %v373, %v381
          %384 = vrot.lane.b32.xlu0 %v345, 124
          %v385 = vpop.permute.xlu0 %384
          %386 = vrot.lane.b32.xlu0 %v346, 124
          %v387 = vpop.permute.xlu0 %386
          %s388 = sld [smem:[#allocation5 + $0x4]]
          %v389 = vstv %s388
          %v390 = vmul.f32 %v389, %v385
          %v391 = vmul.f32 %v389, %v387
          %v392 = vadd.f32 %v382, %v390
          %v393 = vadd.f32 %v383, %v391
          %394 = vrot.lane.b32.xlu0 %v345, 123
          %v395 = vpop.permute.xlu0 %394
          %396 = vrot.lane.b32.xlu0 %v346, 123
          %v397 = vpop.permute.xlu0 %396
          %s398 = sld [smem:[#allocation5 + $0x5]]
          %v399 = vstv %s398
          %v400 = vmul.f32 %v399, %v395
          %v401 = vmul.f32 %v399, %v397
          %v402 = vadd.f32 %v392, %v400
          %v403 = vadd.f32 %v393, %v401
          %404 = vrot.lane.b32.xlu0 %v345, 122
          %v405 = vpop.permute.xlu0 %404
          %406 = vrot.lane.b32.xlu0 %v346, 122
          %v407 = vpop.permute.xlu0 %406
          %s408 = sld [smem:[#allocation5 + $0x6]]
          %v409 = vstv %s408
          %v410 = vmul.f32 %v409, %v405
          %v411 = vmul.f32 %v409, %v407
          %v412 = vadd.f32 %v402, %v410
          %v413 = vadd.f32 %v403, %v411
          %s414 = sld [smem:[#allocation5 + $0x7]]
          %v415 = vstv %s414
          %v416 = vmul.f32 %v415, %v345
          %v417 = vmul.f32 %v415, %v346
          %v418 = vmul.f32 %v415, %v347
          %vm422 = vcmask 1046528
          %v423 = vrot.slane %v416, 1
          %v424 = vrot.slane %v417, 1
          %v425 = vsel %vm422, %v423, %v424
          %v426 = vrot.slane %v418, 1
          %v427 = vsel %vm422, %v424, %v426
          %v430 = vadd.f32 %v412, %v425
          %v431 = vadd.f32 %v413, %v427
          %v435 = vrot.slane %v345, 1
          %v436 = vrot.slane %v346, 1
          %v437 = vsel %vm422, %v435, %v436
          %v438 = vrot.slane %v347, 1
          %v439 = vsel %vm422, %v436, %v438
          %442 = vrot.lane.b32.xlu0 %v437, 127
          %v443 = vpop.permute.xlu0 %442
          %444 = vrot.lane.b32.xlu0 %v439, 127
          %v445 = vpop.permute.xlu0 %444
          %s446 = sld [smem:[#allocation5 + $0x8]]
          %v447 = vstv %s446
          %v448 = vmul.f32 %v447, %v443
          %v449 = vmul.f32 %v447, %v445
          %v450 = vadd.f32 %v430, %v448
          %v451 = vadd.f32 %v431, %v449
          %452 = vrot.lane.b32.xlu0 %v437, 126
          %v453 = vpop.permute.xlu0 %452
          %454 = vrot.lane.b32.xlu0 %v439, 126
          %v455 = vpop.permute.xlu0 %454
          %s456 = sld [smem:[#allocation5 + $0x9]]
          %v457 = vstv %s456
          %v458 = vmul.f32 %v457, %v453
          %v459 = vmul.f32 %v457, %v455
          %v460 = vadd.f32 %v450, %v458
          %v461 = vadd.f32 %v451, %v459
          %462 = vrot.lane.b32.xlu0 %v437, 125
          %v463 = vpop.permute.xlu0 %462
          %464 = vrot.lane.b32.xlu0 %v439, 125
          %v465 = vpop.permute.xlu0 %464
          %s466 = sld [smem:[#allocation5 + $0xa]]
          %v467 = vstv %s466
          %v468 = vmul.f32 %v467, %v463
          %v469 = vmul.f32 %v467, %v465
          %v470 = vadd.f32 %v460, %v468
          %v471 = vadd.f32 %v461, %v469
          %472 = vrot.lane.b32.xlu0 %v437, 124
          %v473 = vpop.permute.xlu0 %472
          %474 = vrot.lane.b32.xlu0 %v439, 124
          %v475 = vpop.permute.xlu0 %474
          %s476 = sld [smem:[#allocation5 + $0xb]]
          %v477 = vstv %s476
          %v478 = vmul.f32 %v477, %v473
          %v479 = vmul.f32 %v477, %v475
          %v480 = vadd.f32 %v470, %v478
          %v481 = vadd.f32 %v471, %v479
          %482 = vrot.lane.b32.xlu0 %v437, 123
          %v483 = vpop.permute.xlu0 %482
          %484 = vrot.lane.b32.xlu0 %v439, 123
          %v485 = vpop.permute.xlu0 %484
          %s486 = sld [smem:[#allocation5 + $0xc]]
          %v487 = vstv %s486
          %v488 = vmul.f32 %v487, %v483
          %v489 = vmul.f32 %v487, %v485
          %v490 = vadd.f32 %v480, %v488
          %v491 = vadd.f32 %v481, %v489
          %492 = vrot.lane.b32.xlu0 %v437, 122
          %v493 = vpop.permute.xlu0 %492
          %494 = vrot.lane.b32.xlu0 %v439, 122
          %v495 = vpop.permute.xlu0 %494
          %s496 = sld [smem:[#allocation5 + $0xd]]
          %v497 = vstv %s496
          %v498 = vmul.f32 %v497, %v493
          %v499 = vmul.f32 %v497, %v495
          %v500 = vadd.f32 %v490, %v498
          %v501 = vadd.f32 %v491, %v499
          %s502 = sld [smem:[#allocation5 + $0xe]]
          %v503 = vstv %s502
          %v504 = vmul.f32 %v503, %v345
          %v505 = vmul.f32 %v503, %v346
          %v506 = vmul.f32 %v503, %v347
          %vm510 = vcmask 1045504
          %v511 = vrot.slane %v504, 2
          %v512 = vrot.slane %v505, 2
          %v513 = vsel %vm510, %v511, %v512
          %v514 = vrot.slane %v506, 2
          %v515 = vsel %vm510, %v512, %v514
          %v518 = vadd.f32 %v500, %v513
          %v519 = vadd.f32 %v501, %v515
          %v520 = vrot.slane %v345, 2
          %v521 = vrot.slane %v346, 2
          %v522 = vsel %vm510, %v520, %v521
          %v523 = vrot.slane %v347, 2
          %v524 = vsel %vm510, %v521, %v523
          %527 = vrot.lane.b32.xlu0 %v522, 127
          %v528 = vpop.permute.xlu0 %527
          %529 = vrot.lane.b32.xlu0 %v524, 127
          %v530 = vpop.permute.xlu0 %529
          %s531 = sld [smem:[#allocation5 + $0xf]]
          %v532 = vstv %s531
          %v533 = vmul.f32 %v532, %v528
          %v534 = vmul.f32 %v532, %v530
          %v535 = vadd.f32 %v518, %v533
          %v536 = vadd.f32 %v519, %v534
          %537 = vrot.lane.b32.xlu0 %v522, 126
          %v538 = vpop.permute.xlu0 %537
          %539 = vrot.lane.b32.xlu0 %v524, 126
          %v540 = vpop.permute.xlu0 %539
          %s541 = sld [smem:[#allocation5 + $0x10]]
          %v542 = vstv %s541
          %v543 = vmul.f32 %v542, %v538
          %v544 = vmul.f32 %v542, %v540
          %v545 = vadd.f32 %v535, %v543
          %v546 = vadd.f32 %v536, %v544
          %547 = vrot.lane.b32.xlu0 %v522, 125
          %v548 = vpop.permute.xlu0 %547
          %549 = vrot.lane.b32.xlu0 %v524, 125
          %v550 = vpop.permute.xlu0 %549
          %s551 = sld [smem:[#allocation5 + $0x11]]
          %v552 = vstv %s551
          %v553 = vmul.f32 %v552, %v548
          %v554 = vmul.f32 %v552, %v550
          %v555 = vadd.f32 %v545, %v553
          %v556 = vadd.f32 %v546, %v554
          %557 = vrot.lane.b32.xlu0 %v522, 124
          %v558 = vpop.permute.xlu0 %557
          %559 = vrot.lane.b32.xlu0 %v524, 124
          %v560 = vpop.permute.xlu0 %559
          %s561 = sld [smem:[#allocation5 + $0x12]]
          %v562 = vstv %s561
          %v563 = vmul.f32 %v562, %v558
          %v564 = vmul.f32 %v562, %v560
          %v565 = vadd.f32 %v555, %v563
          %v566 = vadd.f32 %v556, %v564
          %567 = vrot.lane.b32.xlu0 %v522, 123
          %v568 = vpop.permute.xlu0 %567
          %569 = vrot.lane.b32.xlu0 %v524, 123
          %v570 = vpop.permute.xlu0 %569
          %s571 = sld [smem:[#allocation5 + $0x13]]
          %v572 = vstv %s571
          %v573 = vmul.f32 %v572, %v568
          %v574 = vmul.f32 %v572, %v570
          %v575 = vadd.f32 %v565, %v573
          %v576 = vadd.f32 %v566, %v574
          %577 = vrot.lane.b32.xlu0 %v522, 122
          %v578 = vpop.permute.xlu0 %577
          %579 = vrot.lane.b32.xlu0 %v524, 122
          %v580 = vpop.permute.xlu0 %579
          %s581 = sld [smem:[#allocation5 + $0x14]]
          %v582 = vstv %s581
          %v583 = vmul.f32 %v582, %v578
          %v584 = vmul.f32 %v582, %v580
          %v585 = vadd.f32 %v575, %v583
          %v586 = vadd.f32 %v576, %v584
          %s587 = sld [smem:[#allocation5 + $0x15]]
          %v588 = vstv %s587
          %v589 = vmul.f32 %v588, %v345
          %v590 = vmul.f32 %v588, %v346
          %v591 = vmul.f32 %v588, %v347
          %v595 = vrot.slane %v589, 3
          %v596 = vrot.slane %v590, 3
          %v597 = vsel %vm253, %v595, %v596
          %v598 = vrot.slane %v591, 3
          %v599 = vsel %vm253, %v596, %v598
          %v602 = vadd.f32 %v585, %v597
          %v603 = vadd.f32 %v586, %v599
          %v604 = vrot.slane %v345, 3
          %v605 = vrot.slane %v346, 3
          %v606 = vsel %vm253, %v604, %v605
          %v607 = vrot.slane %v347, 3
          %v608 = vsel %vm253, %v605, %v607
          %611 = vrot.lane.b32.xlu0 %v606, 127
          %v612 = vpop.permute.xlu0 %611
          %613 = vrot.lane.b32.xlu0 %v608, 127
          %v614 = vpop.permute.xlu0 %613
          %s615 = sld [smem:[#allocation5 + $0x16]]
          %v616 = vstv %s615
          %v617 = vmul.f32 %v616, %v612
          %v618 = vmul.f32 %v616, %v614
          %v619 = vadd.f32 %v602, %v617
          %v620 = vadd.f32 %v603, %v618
          %621 = vrot.lane.b32.xlu0 %v606, 126
          %v622 = vpop.permute.xlu0 %621
          %623 = vrot.lane.b32.xlu0 %v608, 126
          %v624 = vpop.permute.xlu0 %623
          %s625 = sld [smem:[#allocation5 + $0x17]]
          %v626 = vstv %s625
          %v627 = vmul.f32 %v626, %v622
          %v628 = vmul.f32 %v626, %v624
          %v629 = vadd.f32 %v619, %v627
          %v630 = vadd.f32 %v620, %v628
          %631 = vrot.lane.b32.xlu0 %v606, 125
          %v632 = vpop.permute.xlu0 %631
          %633 = vrot.lane.b32.xlu0 %v608, 125
          %v634 = vpop.permute.xlu0 %633
          %s635 = sld [smem:[#allocation5 + $0x18]]
          %v636 = vstv %s635
          %v637 = vmul.f32 %v636, %v632
          %v638 = vmul.f32 %v636, %v634
          %v639 = vadd.f32 %v629, %v637
          %v640 = vadd.f32 %v630, %v638
          %641 = vrot.lane.b32.xlu0 %v606, 124
          %v642 = vpop.permute.xlu0 %641
          %643 = vrot.lane.b32.xlu0 %v608, 124
          %v644 = vpop.permute.xlu0 %643
          %s645 = sld [smem:[#allocation5 + $0x19]]
          %v646 = vstv %s645
          %v647 = vmul.f32 %v646, %v642
          %v648 = vmul.f32 %v646, %v644
          %v649 = vadd.f32 %v639, %v647
          %v650 = vadd.f32 %v640, %v648
          %651 = vrot.lane.b32.xlu0 %v606, 123
          %v652 = vpop.permute.xlu0 %651
          %653 = vrot.lane.b32.xlu0 %v608, 123
          %v654 = vpop.permute.xlu0 %653
          %s655 = sld [smem:[#allocation5 + $0x1a]]
          %v656 = vstv %s655
          %v657 = vmul.f32 %v656, %v652
          %v658 = vmul.f32 %v656, %v654
          %v659 = vadd.f32 %v649, %v657
          %v660 = vadd.f32 %v650, %v658
          %661 = vrot.lane.b32.xlu0 %v606, 122
          %v662 = vpop.permute.xlu0 %661
          %663 = vrot.lane.b32.xlu0 %v608, 122
          %v664 = vpop.permute.xlu0 %663
          %s665 = sld [smem:[#allocation5 + $0x1b]]
          %v666 = vstv %s665
          %v667 = vmul.f32 %v666, %v662
          %v668 = vmul.f32 %v666, %v664
          %v669 = vadd.f32 %v659, %v667
          %v670 = vadd.f32 %v660, %v668
          %s671 = sld [smem:[#allocation5 + $0x1c]]
          %v672 = vstv %s671
          %v673 = vmul.f32 %v672, %v345
          %v674 = vmul.f32 %v672, %v346
          %v675 = vmul.f32 %v672, %v347
          %v679 = vrot.slane %v673, 4
          %v680 = vrot.slane %v674, 4
          %v681 = vsel %vm251, %v679, %v680
          %v682 = vrot.slane %v675, 4
          %v683 = vsel %vm251, %v680, %v682
          %v686 = vadd.f32 %v669, %v681
          %v687 = vadd.f32 %v670, %v683
          %v688 = vrot.slane %v345, 4
          %v689 = vrot.slane %v346, 4
          %v690 = vsel %vm251, %v688, %v689
          %v691 = vrot.slane %v347, 4
          %v692 = vsel %vm251, %v689, %v691
          %695 = vrot.lane.b32.xlu0 %v690, 127
          %v696 = vpop.permute.xlu0 %695
          %697 = vrot.lane.b32.xlu0 %v692, 127
          %v698 = vpop.permute.xlu0 %697
          %s699 = sld [smem:[#allocation5 + $0x1d]]
          %v700 = vstv %s699
          %v701 = vmul.f32 %v700, %v696
          %v702 = vmul.f32 %v700, %v698
          %v703 = vadd.f32 %v686, %v701
          %v704 = vadd.f32 %v687, %v702
          %705 = vrot.lane.b32.xlu0 %v690, 126
          %v706 = vpop.permute.xlu0 %705
          %707 = vrot.lane.b32.xlu0 %v692, 126
          %v708 = vpop.permute.xlu0 %707
          %s709 = sld [smem:[#allocation5 + $0x1e]]
          %v710 = vstv %s709
          %v711 = vmul.f32 %v710, %v706
          %v712 = vmul.f32 %v710, %v708
          %v713 = vadd.f32 %v703, %v711
          %v714 = vadd.f32 %v704, %v712
          %715 = vrot.lane.b32.xlu0 %v690, 125
          %v716 = vpop.permute.xlu0 %715
          %717 = vrot.lane.b32.xlu0 %v692, 125
          %v718 = vpop.permute.xlu0 %717
          %s719 = sld [smem:[#allocation5 + $0x1f]]
          %v720 = vstv %s719
          %v721 = vmul.f32 %v720, %v716
          %v722 = vmul.f32 %v720, %v718
          %v723 = vadd.f32 %v713, %v721
          %v724 = vadd.f32 %v714, %v722
          %725 = vrot.lane.b32.xlu0 %v690, 124
          %v726 = vpop.permute.xlu0 %725
          %727 = vrot.lane.b32.xlu0 %v692, 124
          %v728 = vpop.permute.xlu0 %727
          %s729 = sld [smem:[#allocation5 + $0x20]]
          %v730 = vstv %s729
          %v731 = vmul.f32 %v730, %v726
          %v732 = vmul.f32 %v730, %v728
          %v733 = vadd.f32 %v723, %v731
          %v734 = vadd.f32 %v724, %v732
          %735 = vrot.lane.b32.xlu0 %v690, 123
          %v736 = vpop.permute.xlu0 %735
          %737 = vrot.lane.b32.xlu0 %v692, 123
          %v738 = vpop.permute.xlu0 %737
          %s739 = sld [smem:[#allocation5 + $0x21]]
          %v740 = vstv %s739
          %v741 = vmul.f32 %v740, %v736
          %v742 = vmul.f32 %v740, %v738
          %v743 = vadd.f32 %v733, %v741
          %v744 = vadd.f32 %v734, %v742
          %745 = vrot.lane.b32.xlu0 %v690, 122
          %v746 = vpop.permute.xlu0 %745
          %747 = vrot.lane.b32.xlu0 %v692, 122
          %v748 = vpop.permute.xlu0 %747
          %s749 = sld [smem:[#allocation5 + $0x22]]
          %v750 = vstv %s749
          %v751 = vmul.f32 %v750, %v746
          %v752 = vmul.f32 %v750, %v748
          %v753 = vadd.f32 %v743, %v751
          %v754 = vadd.f32 %v744, %v752
          %s755 = sld [smem:[#allocation5 + $0x23]]
          %v756 = vstv %s755
          %v757 = vmul.f32 %v756, %v345
          %v758 = vmul.f32 %v756, %v346
          %v759 = vmul.f32 %v756, %v347
          %v763 = vrot.slane %v757, 5
          %v764 = vrot.slane %v758, 5
          %v765 = vsel %vm233, %v763, %v764
          %v766 = vrot.slane %v759, 5
          %v767 = vsel %vm233, %v764, %v766
          %v770 = vadd.f32 %v753, %v765
          %v771 = vadd.f32 %v754, %v767
          %v772 = vrot.slane %v345, 5
          %v773 = vrot.slane %v346, 5
          %v774 = vsel %vm233, %v772, %v773
          %v775 = vrot.slane %v347, 5
          %v776 = vsel %vm233, %v773, %v775
          %779 = vrot.lane.b32.xlu0 %v774, 127
          %v780 = vpop.permute.xlu0 %779
          %781 = vrot.lane.b32.xlu0 %v776, 127
          %v782 = vpop.permute.xlu0 %781
          %s783 = sld [smem:[#allocation5 + $0x24]]
          %v784 = vstv %s783
          %v785 = vmul.f32 %v784, %v780
          %v786 = vmul.f32 %v784, %v782
          %v787 = vadd.f32 %v770, %v785
          %v788 = vadd.f32 %v771, %v786
          %789 = vrot.lane.b32.xlu0 %v774, 126
          %v790 = vpop.permute.xlu0 %789
          %791 = vrot.lane.b32.xlu0 %v776, 126
          %v792 = vpop.permute.xlu0 %791
          %s793 = sld [smem:[#allocation5 + $0x25]]
          %v794 = vstv %s793
          %v795 = vmul.f32 %v794, %v790
          %v796 = vmul.f32 %v794, %v792
          %v797 = vadd.f32 %v787, %v795
          %v798 = vadd.f32 %v788, %v796
          %799 = vrot.lane.b32.xlu0 %v774, 125
          %v800 = vpop.permute.xlu0 %799
          %801 = vrot.lane.b32.xlu0 %v776, 125
          %v802 = vpop.permute.xlu0 %801
          %s803 = sld [smem:[#allocation5 + $0x26]]
          %v804 = vstv %s803
          %v805 = vmul.f32 %v804, %v800
          %v806 = vmul.f32 %v804, %v802
          %v807 = vadd.f32 %v797, %v805
          %v808 = vadd.f32 %v798, %v806
          %809 = vrot.lane.b32.xlu0 %v774, 124
          %v810 = vpop.permute.xlu0 %809
          %811 = vrot.lane.b32.xlu0 %v776, 124
          %v812 = vpop.permute.xlu0 %811
          %s813 = sld [smem:[#allocation5 + $0x27]]
          %v814 = vstv %s813
          %v815 = vmul.f32 %v814, %v810
          %v816 = vmul.f32 %v814, %v812
          %v817 = vadd.f32 %v807, %v815
          %v818 = vadd.f32 %v808, %v816
          %819 = vrot.lane.b32.xlu0 %v774, 123
          %v820 = vpop.permute.xlu0 %819
          %821 = vrot.lane.b32.xlu0 %v776, 123
          %v822 = vpop.permute.xlu0 %821
          %s823 = sld [smem:[#allocation5 + $0x28]]
          %v824 = vstv %s823
          %v825 = vmul.f32 %v824, %v820
          %v826 = vmul.f32 %v824, %v822
          %v827 = vadd.f32 %v817, %v825
          %v828 = vadd.f32 %v818, %v826
          %829 = vrot.lane.b32.xlu0 %v774, 122
          %v830 = vpop.permute.xlu0 %829
          %831 = vrot.lane.b32.xlu0 %v776, 122
          %v832 = vpop.permute.xlu0 %831
          %s833 = sld [smem:[#allocation5 + $0x29]]
          %v834 = vstv %s833
          %v835 = vmul.f32 %v834, %v830
          %v836 = vmul.f32 %v834, %v832
          %v837 = vadd.f32 %v827, %v835
          %v838 = vadd.f32 %v828, %v836
          %s839 = sld [smem:[#allocation5 + $0x2a]]
          %v840 = vstv %s839
          %v841 = vmul.f32 %v840, %v345
          %v842 = vmul.f32 %v840, %v346
          %v843 = vmul.f32 %v840, %v347
          %v847 = vrot.slane %v841, 6
          %v848 = vrot.slane %v842, 6
          %v849 = vsel %vm247, %v847, %v848
          %v850 = vrot.slane %v843, 6
          %v851 = vsel %vm247, %v848, %v850
          %v854 = vadd.f32 %v837, %v849
          %v855 = vadd.f32 %v838, %v851
          %v856 = vrot.slane %v345, 6
          %v857 = vrot.slane %v346, 6
          %v858 = vsel %vm247, %v856, %v857
          %v859 = vrot.slane %v347, 6
          %v860 = vsel %vm247, %v857, %v859
          %863 = vrot.lane.b32.xlu0 %v858, 127
          %v864 = vpop.permute.xlu0 %863
          %865 = vrot.lane.b32.xlu0 %v860, 127
          %v866 = vpop.permute.xlu0 %865
          %s867 = sld [smem:[#allocation5 + $0x2b]]
          %v868 = vstv %s867
          %v869 = vmul.f32 %v868, %v864
          %v870 = vmul.f32 %v868, %v866
          %v871 = vadd.f32 %v854, %v869
          %v872 = vadd.f32 %v855, %v870
          %873 = vrot.lane.b32.xlu0 %v858, 126
          %v874 = vpop.permute.xlu0 %873
          %875 = vrot.lane.b32.xlu0 %v860, 126
          %v876 = vpop.permute.xlu0 %875
          %s877 = sld [smem:[#allocation5 + $0x2c]]
          %v878 = vstv %s877
          %v879 = vmul.f32 %v878, %v874
          %v880 = vmul.f32 %v878, %v876
          %v881 = vadd.f32 %v871, %v879
          %v882 = vadd.f32 %v872, %v880
          %883 = vrot.lane.b32.xlu0 %v858, 125
          %v884 = vpop.permute.xlu0 %883
          %885 = vrot.lane.b32.xlu0 %v860, 125
          %v886 = vpop.permute.xlu0 %885
          %s887 = sld [smem:[#allocation5 + $0x2d]]
          %v888 = vstv %s887
          %v889 = vmul.f32 %v888, %v884
          %v890 = vmul.f32 %v888, %v886
          %v891 = vadd.f32 %v881, %v889
          %v892 = vadd.f32 %v882, %v890
          %893 = vrot.lane.b32.xlu0 %v858, 124
          %v894 = vpop.permute.xlu0 %893
          %895 = vrot.lane.b32.xlu0 %v860, 124
          %v896 = vpop.permute.xlu0 %895
          %s897 = sld [smem:[#allocation5 + $0x2e]]
          %v898 = vstv %s897
          %v899 = vmul.f32 %v898, %v894
          %v900 = vmul.f32 %v898, %v896
          %v901 = vadd.f32 %v891, %v899
          %v902 = vadd.f32 %v892, %v900
          %903 = vrot.lane.b32.xlu0 %v858, 123
          %v904 = vpop.permute.xlu0 %903
          %905 = vrot.lane.b32.xlu0 %v860, 123
          %v906 = vpop.permute.xlu0 %905
          %s907 = sld [smem:[#allocation5 + $0x2f]]
          %v908 = vstv %s907
          %v909 = vmul.f32 %v908, %v904
          %v910 = vmul.f32 %v908, %v906
          %v911 = vadd.f32 %v901, %v909
          %v912 = vadd.f32 %v902, %v910
          %913 = vrot.lane.b32.xlu0 %v858, 122
          %v914 = vpop.permute.xlu0 %913
          %915 = vrot.lane.b32.xlu0 %v860, 122
          %v916 = vpop.permute.xlu0 %915
          %s917 = sld [smem:[#allocation5 + $0x30]]
          %v918 = vstv %s917
          %v919 = vmul.f32 %v918, %v914
          %v920 = vmul.f32 %v918, %v916
          %v921 = vadd.f32 %v911, %v919
          %v922 = vadd.f32 %v912, %v920
          %v923 = vld [vmem:[#allocation3] sm:$0xff]
          %v924 = vld [vmem:[#allocation3 + $0x8] sm:$0xff]
          %v926 = vrot.slane %v923, 3
          %v928 = vrot.slane %v923, 1
          %v930 = vrot.slane %v923, 7
          %v933 = vrot.slane %v923, 5
          %v934 = vrot.slane %v924, 5
          %v935 = vsel %vm233, %v933, %v934
          %v938 = vrot.slane %v924, 3
          %v940 = vrot.slane %v924, 1
          %v942 = vrot.slane %v924, 7
          %v944 = vsel %vm245, %v926, %v928
          %v945 = vsel %vm247, %v944, %v930
          %v946 = vsel %vm233, %v945, %v933
          %v947 = vsel %vm233, %v934, %v938
          %v948 = vsel %vm251, %v947, %v940
          %v949 = vsel %vm253, %v948, %v942
          %952 = vrot.lane.b32.xlu0 %v946, 125
          %v953 = vpop.permute.xlu0 %952
          %954 = vrot.lane.b32.xlu0 %v935, 125
          %v955 = vpop.permute.xlu0 %954
          %956 = vrot.lane.b32.xlu0 %v949, 125
          %v957 = vpop.permute.xlu0 %956
          %961 = vrot.lane.b32.xlu0 %v946, 127
          %v962 = vpop.permute.xlu0 %961
          %963 = vrot.lane.b32.xlu0 %v935, 127
          %v964 = vpop.permute.xlu0 %963
          %965 = vrot.lane.b32.xlu0 %v949, 127
          %v966 = vpop.permute.xlu0 %965
          %970 = vrot.lane.b32.xlu0 %v946, 1
          %v971 = vpop.permute.xlu0 %970
          %972 = vrot.lane.b32.xlu0 %v935, 1
          %v973 = vpop.permute.xlu0 %972
          %974 = vrot.lane.b32.xlu0 %v949, 1
          %v975 = vpop.permute.xlu0 %974
          %979 = vrot.lane.b32.xlu0 %v946, 3
          %v980 = vpop.permute.xlu0 %979
          %981 = vrot.lane.b32.xlu0 %v935, 3
          %v982 = vpop.permute.xlu0 %981
          %983 = vrot.lane.b32.xlu0 %v949, 3
          %v984 = vpop.permute.xlu0 %983
          %988 = vrot.lane.b32.xlu0 %v946, 5
          %v989 = vpop.permute.xlu0 %988
          %990 = vrot.lane.b32.xlu0 %v935, 5
          %v991 = vpop.permute.xlu0 %990
          %992 = vrot.lane.b32.xlu0 %v949, 5
          %v993 = vpop.permute.xlu0 %992
          %997 = vrot.lane.b32.xlu0 %v946, 7
          %v998 = vpop.permute.xlu0 %997
          %999 = vrot.lane.b32.xlu0 %v935, 7
          %v1000 = vpop.permute.xlu0 %999
          %1001 = vrot.lane.b32.xlu0 %v949, 7
          %v1002 = vpop.permute.xlu0 %1001
          %1006 = vrot.lane.b32.xlu0 %v946, 9
          %v1007 = vpop.permute.xlu0 %1006
          %1008 = vrot.lane.b32.xlu0 %v935, 9
          %v1009 = vpop.permute.xlu0 %1008
          %1010 = vrot.lane.b32.xlu0 %v949, 9
          %v1011 = vpop.permute.xlu0 %1010
          %v1015 = vsel %vm320, %v953, %v962
          %v1016 = vsel %vm320, %v955, %v964
          %v1017 = vsel %vm320, %v957, %v966
          %v1018 = vsel %vm324, %v1015, %v971
          %v1019 = vsel %vm324, %v1016, %v973
          %v1020 = vsel %vm324, %v1017, %v975
          %v1021 = vsel %vm328, %v1018, %v980
          %v1022 = vsel %vm328, %v1019, %v982
          %v1023 = vsel %vm328, %v1020, %v984
          %v1024 = vsel %vm332, %v1021, %v989
          %v1025 = vsel %vm332, %v1022, %v991
          %v1026 = vsel %vm332, %v1023, %v993
          %v1027 = vsel %vm336, %v1024, %v998
          %v1028 = vsel %vm336, %v1025, %v1000
          %v1029 = vsel %vm336, %v1026, %v1002
          %v1030 = vsel %vm340, %v1027, %v1007
          %v1031 = vsel %vm340, %v1028, %v1009
          %v1032 = vsel %vm340, %v1029, %v1011
          %v1033 = vsel %vm344, %v1030, 0.0
          %v1034 = vsel %vm344, %v1031, 0.0
          %v1035 = vsel %vm344, %v1032, 0.0
          %s1036 = sld [smem:[#allocation5 + $0x31]]
          %v1037 = vstv %s1036
          %v1038 = vmul.f32 %v1037, %v1033
          %v1039 = vmul.f32 %v1037, %v1034
          %v1040 = vadd.f32 %v921, %v1038
          %v1041 = vadd.f32 %v922, %v1039
          %1042 = vrot.lane.b32.xlu0 %v1033, 127
          %v1043 = vpop.permute.xlu0 %1042
          %1044 = vrot.lane.b32.xlu0 %v1034, 127
          %v1045 = vpop.permute.xlu0 %1044
          %s1046 = sld [smem:[#allocation5 + $0x32]]
          %v1047 = vstv %s1046
          %v1048 = vmul.f32 %v1047, %v1043
          %v1049 = vmul.f32 %v1047, %v1045
          %v1050 = vadd.f32 %v1040, %v1048
          %v1051 = vadd.f32 %v1041, %v1049
          %1052 = vrot.lane.b32.xlu0 %v1033, 126
          %v1053 = vpop.permute.xlu0 %1052
          %1054 = vrot.lane.b32.xlu0 %v1034, 126
          %v1055 = vpop.permute.xlu0 %1054
          %s1056 = sld [smem:[#allocation5 + $0x33]]
          %v1057 = vstv %s1056
          %v1058 = vmul.f32 %v1057, %v1053
          %v1059 = vmul.f32 %v1057, %v1055
          %v1060 = vadd.f32 %v1050, %v1058
          %v1061 = vadd.f32 %v1051, %v1059
          %1062 = vrot.lane.b32.xlu0 %v1033, 125
          %v1063 = vpop.permute.xlu0 %1062
          %1064 = vrot.lane.b32.xlu0 %v1034, 125
          %v1065 = vpop.permute.xlu0 %1064
          %s1066 = sld [smem:[#allocation5 + $0x34]]
          %v1067 = vstv %s1066
          %v1068 = vmul.f32 %v1067, %v1063
          %v1069 = vmul.f32 %v1067, %v1065
          %v1070 = vadd.f32 %v1060, %v1068
          %v1071 = vadd.f32 %v1061, %v1069
          %1072 = vrot.lane.b32.xlu0 %v1033, 124
          %v1073 = vpop.permute.xlu0 %1072
          %1074 = vrot.lane.b32.xlu0 %v1034, 124
          %v1075 = vpop.permute.xlu0 %1074
          %s1076 = sld [smem:[#allocation5 + $0x35]]
          %v1077 = vstv %s1076
          %v1078 = vmul.f32 %v1077, %v1073
          %v1079 = vmul.f32 %v1077, %v1075
          %v1080 = vadd.f32 %v1070, %v1078
          %v1081 = vadd.f32 %v1071, %v1079
          %1082 = vrot.lane.b32.xlu0 %v1033, 123
          %v1083 = vpop.permute.xlu0 %1082
          %1084 = vrot.lane.b32.xlu0 %v1034, 123
          %v1085 = vpop.permute.xlu0 %1084
          %s1086 = sld [smem:[#allocation5 + $0x36]]
          %v1087 = vstv %s1086
          %v1088 = vmul.f32 %v1087, %v1083
          %v1089 = vmul.f32 %v1087, %v1085
          %v1090 = vadd.f32 %v1080, %v1088
          %v1091 = vadd.f32 %v1081, %v1089
          %1092 = vrot.lane.b32.xlu0 %v1033, 122
          %v1093 = vpop.permute.xlu0 %1092
          %1094 = vrot.lane.b32.xlu0 %v1034, 122
          %v1095 = vpop.permute.xlu0 %1094
          %s1096 = sld [smem:[#allocation5 + $0x37]]
          %v1097 = vstv %s1096
          %v1098 = vmul.f32 %v1097, %v1093
          %v1099 = vmul.f32 %v1097, %v1095
          %v1100 = vadd.f32 %v1090, %v1098
          %v1101 = vadd.f32 %v1091, %v1099
          %s1102 = sld [smem:[#allocation5 + $0x38]]
          %v1103 = vstv %s1102
          %v1104 = vmul.f32 %v1103, %v1033
          %v1105 = vmul.f32 %v1103, %v1034
          %v1106 = vmul.f32 %v1103, %v1035
          %v1110 = vrot.slane %v1104, 1
          %v1111 = vrot.slane %v1105, 1
          %v1112 = vsel %vm422, %v1110, %v1111
          %v1113 = vrot.slane %v1106, 1
          %v1114 = vsel %vm422, %v1111, %v1113
          %v1117 = vadd.f32 %v1100, %v1112
          %v1118 = vadd.f32 %v1101, %v1114
          %v1122 = vrot.slane %v1033, 1
          %v1123 = vrot.slane %v1034, 1
          %v1124 = vsel %vm422, %v1122, %v1123
          %v1125 = vrot.slane %v1035, 1
          %v1126 = vsel %vm422, %v1123, %v1125
          %1129 = vrot.lane.b32.xlu0 %v1124, 127
          %v1130 = vpop.permute.xlu0 %1129
          %1131 = vrot.lane.b32.xlu0 %v1126, 127
          %v1132 = vpop.permute.xlu0 %1131
          %s1133 = sld [smem:[#allocation5 + $0x39]]
          %v1134 = vstv %s1133
          %v1135 = vmul.f32 %v1134, %v1130
          %v1136 = vmul.f32 %v1134, %v1132
          %v1137 = vadd.f32 %v1117, %v1135
          %v1138 = vadd.f32 %v1118, %v1136
          %1139 = vrot.lane.b32.xlu0 %v1124, 126
          %v1140 = vpop.permute.xlu0 %1139
          %1141 = vrot.lane.b32.xlu0 %v1126, 126
          %v1142 = vpop.permute.xlu0 %1141
          %s1143 = sld [smem:[#allocation5 + $0x3a]]
          %v1144 = vstv %s1143
          %v1145 = vmul.f32 %v1144, %v1140
          %v1146 = vmul.f32 %v1144, %v1142
          %v1147 = vadd.f32 %v1137, %v1145
          %v1148 = vadd.f32 %v1138, %v1146
          %1149 = vrot.lane.b32.xlu0 %v1124, 125
          %v1150 = vpop.permute.xlu0 %1149
          %1151 = vrot.lane.b32.xlu0 %v1126, 125
          %v1152 = vpop.permute.xlu0 %1151
          %s1153 = sld [smem:[#allocation5 + $0x3b]]
          %v1154 = vstv %s1153
          %v1155 = vmul.f32 %v1154, %v1150
          %v1156 = vmul.f32 %v1154, %v1152
          %v1157 = vadd.f32 %v1147, %v1155
          %v1158 = vadd.f32 %v1148, %v1156
          %1159 = vrot.lane.b32.xlu0 %v1124, 124
          %v1160 = vpop.permute.xlu0 %1159
          %1161 = vrot.lane.b32.xlu0 %v1126, 124
          %v1162 = vpop.permute.xlu0 %1161
          %s1163 = sld [smem:[#allocation5 + $0x3c]]
          %v1164 = vstv %s1163
          %v1165 = vmul.f32 %v1164, %v1160
          %v1166 = vmul.f32 %v1164, %v1162
          %v1167 = vadd.f32 %v1157, %v1165
          %v1168 = vadd.f32 %v1158, %v1166
          %1169 = vrot.lane.b32.xlu0 %v1124, 123
          %v1170 = vpop.permute.xlu0 %1169
          %1171 = vrot.lane.b32.xlu0 %v1126, 123
          %v1172 = vpop.permute.xlu0 %1171
          %s1173 = sld [smem:[#allocation5 + $0x3d]]
          %v1174 = vstv %s1173
          %v1175 = vmul.f32 %v1174, %v1170
          %v1176 = vmul.f32 %v1174, %v1172
          %v1177 = vadd.f32 %v1167, %v1175
          %v1178 = vadd.f32 %v1168, %v1176
          %1179 = vrot.lane.b32.xlu0 %v1124, 122
          %v1180 = vpop.permute.xlu0 %1179
          %1181 = vrot.lane.b32.xlu0 %v1126, 122
          %v1182 = vpop.permute.xlu0 %1181
          %s1183 = sld [smem:[#allocation5 + $0x3e]]
          %v1184 = vstv %s1183
          %v1185 = vmul.f32 %v1184, %v1180
          %v1186 = vmul.f32 %v1184, %v1182
          %v1187 = vadd.f32 %v1177, %v1185
          %v1188 = vadd.f32 %v1178, %v1186
          %s1189 = sld [smem:[#allocation5 + $0x3f]]
          %v1190 = vstv %s1189
          %v1191 = vmul.f32 %v1190, %v1033
          %v1192 = vmul.f32 %v1190, %v1034
          %v1193 = vmul.f32 %v1190, %v1035
          %v1197 = vrot.slane %v1191, 2
          %v1198 = vrot.slane %v1192, 2
          %v1199 = vsel %vm510, %v1197, %v1198
          %v1200 = vrot.slane %v1193, 2
          %v1201 = vsel %vm510, %v1198, %v1200
          %v1204 = vadd.f32 %v1187, %v1199
          %v1205 = vadd.f32 %v1188, %v1201
          %v1206 = vrot.slane %v1033, 2
          %v1207 = vrot.slane %v1034, 2
          %v1208 = vsel %vm510, %v1206, %v1207
          %v1209 = vrot.slane %v1035, 2
          %v1210 = vsel %vm510, %v1207, %v1209
          %1213 = vrot.lane.b32.xlu0 %v1208, 127
          %v1214 = vpop.permute.xlu0 %1213
          %1215 = vrot.lane.b32.xlu0 %v1210, 127
          %v1216 = vpop.permute.xlu0 %1215
          %s1217 = sld [smem:[#allocation5 + $0x40]]
          %v1218 = vstv %s1217
          %v1219 = vmul.f32 %v1218, %v1214
          %v1220 = vmul.f32 %v1218, %v1216
          %v1221 = vadd.f32 %v1204, %v1219
          %v1222 = vadd.f32 %v1205, %v1220
          %1223 = vrot.lane.b32.xlu0 %v1208, 126
          %v1224 = vpop.permute.xlu0 %1223
          %1225 = vrot.lane.b32.xlu0 %v1210, 126
          %v1226 = vpop.permute.xlu0 %1225
          %s1227 = sld [smem:[#allocation5 + $0x41]]
          %v1228 = vstv %s1227
          %v1229 = vmul.f32 %v1228, %v1224
          %v1230 = vmul.f32 %v1228, %v1226
          %v1231 = vadd.f32 %v1221, %v1229
          %v1232 = vadd.f32 %v1222, %v1230
          %1233 = vrot.lane.b32.xlu0 %v1208, 125
          %v1234 = vpop.permute.xlu0 %1233
          %1235 = vrot.lane.b32.xlu0 %v1210, 125
          %v1236 = vpop.permute.xlu0 %1235
          %s1237 = sld [smem:[#allocation5 + $0x42]]
          %v1238 = vstv %s1237
          %v1239 = vmul.f32 %v1238, %v1234
          %v1240 = vmul.f32 %v1238, %v1236
          %v1241 = vadd.f32 %v1231, %v1239
          %v1242 = vadd.f32 %v1232, %v1240
          %1243 = vrot.lane.b32.xlu0 %v1208, 124
          %v1244 = vpop.permute.xlu0 %1243
          %1245 = vrot.lane.b32.xlu0 %v1210, 124
          %v1246 = vpop.permute.xlu0 %1245
          %s1247 = sld [smem:[#allocation5 + $0x43]]
          %v1248 = vstv %s1247
          %v1249 = vmul.f32 %v1248, %v1244
          %v1250 = vmul.f32 %v1248, %v1246
          %v1251 = vadd.f32 %v1241, %v1249
          %v1252 = vadd.f32 %v1242, %v1250
          %1253 = vrot.lane.b32.xlu0 %v1208, 123
          %v1254 = vpop.permute.xlu0 %1253
          %1255 = vrot.lane.b32.xlu0 %v1210, 123
          %v1256 = vpop.permute.xlu0 %1255
          %s1257 = sld [smem:[#allocation5 + $0x44]]
          %v1258 = vstv %s1257
          %v1259 = vmul.f32 %v1258, %v1254
          %v1260 = vmul.f32 %v1258, %v1256
          %v1261 = vadd.f32 %v1251, %v1259
          %v1262 = vadd.f32 %v1252, %v1260
          %1263 = vrot.lane.b32.xlu0 %v1208, 122
          %v1264 = vpop.permute.xlu0 %1263
          %1265 = vrot.lane.b32.xlu0 %v1210, 122
          %v1266 = vpop.permute.xlu0 %1265
          %s1267 = sld [smem:[#allocation5 + $0x45]]
          %v1268 = vstv %s1267
          %v1269 = vmul.f32 %v1268, %v1264
          %v1270 = vmul.f32 %v1268, %v1266
          %v1271 = vadd.f32 %v1261, %v1269
          %v1272 = vadd.f32 %v1262, %v1270
          %s1273 = sld [smem:[#allocation5 + $0x46]]
          %v1274 = vstv %s1273
          %v1275 = vmul.f32 %v1274, %v1033
          %v1276 = vmul.f32 %v1274, %v1034
          %v1277 = vmul.f32 %v1274, %v1035
          %v1281 = vrot.slane %v1275, 3
          %v1282 = vrot.slane %v1276, 3
          %v1283 = vsel %vm253, %v1281, %v1282
          %v1284 = vrot.slane %v1277, 3
          %v1285 = vsel %vm253, %v1282, %v1284
          %v1288 = vadd.f32 %v1271, %v1283
          %v1289 = vadd.f32 %v1272, %v1285
          %v1290 = vrot.slane %v1033, 3
          %v1291 = vrot.slane %v1034, 3
          %v1292 = vsel %vm253, %v1290, %v1291
          %v1293 = vrot.slane %v1035, 3
          %v1294 = vsel %vm253, %v1291, %v1293
          %1297 = vrot.lane.b32.xlu0 %v1292, 127
          %v1298 = vpop.permute.xlu0 %1297
          %1299 = vrot.lane.b32.xlu0 %v1294, 127
          %v1300 = vpop.permute.xlu0 %1299
          %s1301 = sld [smem:[#allocation5 + $0x47]]
          %v1302 = vstv %s1301
          %v1303 = vmul.f32 %v1302, %v1298
          %v1304 = vmul.f32 %v1302, %v1300
          %v1305 = vadd.f32 %v1288, %v1303
          %v1306 = vadd.f32 %v1289, %v1304
          %1307 = vrot.lane.b32.xlu0 %v1292, 126
          %v1308 = vpop.permute.xlu0 %1307
          %1309 = vrot.lane.b32.xlu0 %v1294, 126
          %v1310 = vpop.permute.xlu0 %1309
          %s1311 = sld [smem:[#allocation5 + $0x48]]
          %v1312 = vstv %s1311
          %v1313 = vmul.f32 %v1312, %v1308
          %v1314 = vmul.f32 %v1312, %v1310
          %v1315 = vadd.f32 %v1305, %v1313
          %v1316 = vadd.f32 %v1306, %v1314
          %1317 = vrot.lane.b32.xlu0 %v1292, 125
          %v1318 = vpop.permute.xlu0 %1317
          %1319 = vrot.lane.b32.xlu0 %v1294, 125
          %v1320 = vpop.permute.xlu0 %1319
          %s1321 = sld [smem:[#allocation5 + $0x49]]
          %v1322 = vstv %s1321
          %v1323 = vmul.f32 %v1322, %v1318
          %v1324 = vmul.f32 %v1322, %v1320
          %v1325 = vadd.f32 %v1315, %v1323
          %v1326 = vadd.f32 %v1316, %v1324
          %1327 = vrot.lane.b32.xlu0 %v1292, 124
          %v1328 = vpop.permute.xlu0 %1327
          %1329 = vrot.lane.b32.xlu0 %v1294, 124
          %v1330 = vpop.permute.xlu0 %1329
          %s1331 = sld [smem:[#allocation5 + $0x4a]]
          %v1332 = vstv %s1331
          %v1333 = vmul.f32 %v1332, %v1328
          %v1334 = vmul.f32 %v1332, %v1330
          %v1335 = vadd.f32 %v1325, %v1333
          %v1336 = vadd.f32 %v1326, %v1334
          %1337 = vrot.lane.b32.xlu0 %v1292, 123
          %v1338 = vpop.permute.xlu0 %1337
          %1339 = vrot.lane.b32.xlu0 %v1294, 123
          %v1340 = vpop.permute.xlu0 %1339
          %s1341 = sld [smem:[#allocation5 + $0x4b]]
          %v1342 = vstv %s1341
          %v1343 = vmul.f32 %v1342, %v1338
          %v1344 = vmul.f32 %v1342, %v1340
          %v1345 = vadd.f32 %v1335, %v1343
          %v1346 = vadd.f32 %v1336, %v1344
          %1347 = vrot.lane.b32.xlu0 %v1292, 122
          %v1348 = vpop.permute.xlu0 %1347
          %1349 = vrot.lane.b32.xlu0 %v1294, 122
          %v1350 = vpop.permute.xlu0 %1349
          %s1351 = sld [smem:[#allocation5 + $0x4c]]
          %v1352 = vstv %s1351
          %v1353 = vmul.f32 %v1352, %v1348
          %v1354 = vmul.f32 %v1352, %v1350
          %v1355 = vadd.f32 %v1345, %v1353
          %v1356 = vadd.f32 %v1346, %v1354
          %s1357 = sld [smem:[#allocation5 + $0x4d]]
          %v1358 = vstv %s1357
          %v1359 = vmul.f32 %v1358, %v1033
          %v1360 = vmul.f32 %v1358, %v1034
          %v1361 = vmul.f32 %v1358, %v1035
          %v1365 = vrot.slane %v1359, 4
          %v1366 = vrot.slane %v1360, 4
          %v1367 = vsel %vm251, %v1365, %v1366
          %v1368 = vrot.slane %v1361, 4
          %v1369 = vsel %vm251, %v1366, %v1368
          %v1372 = vadd.f32 %v1355, %v1367
          %v1373 = vadd.f32 %v1356, %v1369
          %v1374 = vrot.slane %v1033, 4
          %v1375 = vrot.slane %v1034, 4
          %v1376 = vsel %vm251, %v1374, %v1375
          %v1377 = vrot.slane %v1035, 4
          %v1378 = vsel %vm251, %v1375, %v1377
          %1381 = vrot.lane.b32.xlu0 %v1376, 127
          %v1382 = vpop.permute.xlu0 %1381
          %1383 = vrot.lane.b32.xlu0 %v1378, 127
          %v1384 = vpop.permute.xlu0 %1383
          %s1385 = sld [smem:[#allocation5 + $0x4e]]
          %v1386 = vstv %s1385
          %v1387 = vmul.f32 %v1386, %v1382
          %v1388 = vmul.f32 %v1386, %v1384
          %v1389 = vadd.f32 %v1372, %v1387
          %v1390 = vadd.f32 %v1373, %v1388
          %1391 = vrot.lane.b32.xlu0 %v1376, 126
          %v1392 = vpop.permute.xlu0 %1391
          %1393 = vrot.lane.b32.xlu0 %v1378, 126
          %v1394 = vpop.permute.xlu0 %1393
          %s1395 = sld [smem:[#allocation5 + $0x4f]]
          %v1396 = vstv %s1395
          %v1397 = vmul.f32 %v1396, %v1392
          %v1398 = vmul.f32 %v1396, %v1394
          %v1399 = vadd.f32 %v1389, %v1397
          %v1400 = vadd.f32 %v1390, %v1398
          %1401 = vrot.lane.b32.xlu0 %v1376, 125
          %v1402 = vpop.permute.xlu0 %1401
          %1403 = vrot.lane.b32.xlu0 %v1378, 125
          %v1404 = vpop.permute.xlu0 %1403
          %s1405 = sld [smem:[#allocation5 + $0x50]]
          %v1406 = vstv %s1405
          %v1407 = vmul.f32 %v1406, %v1402
          %v1408 = vmul.f32 %v1406, %v1404
          %v1409 = vadd.f32 %v1399, %v1407
          %v1410 = vadd.f32 %v1400, %v1408
          %1411 = vrot.lane.b32.xlu0 %v1376, 124
          %v1412 = vpop.permute.xlu0 %1411
          %1413 = vrot.lane.b32.xlu0 %v1378, 124
          %v1414 = vpop.permute.xlu0 %1413
          %s1415 = sld [smem:[#allocation5 + $0x51]]
          %v1416 = vstv %s1415
          %v1417 = vmul.f32 %v1416, %v1412
          %v1418 = vmul.f32 %v1416, %v1414
          %v1419 = vadd.f32 %v1409, %v1417
          %v1420 = vadd.f32 %v1410, %v1418
          %1421 = vrot.lane.b32.xlu0 %v1376, 123
          %v1422 = vpop.permute.xlu0 %1421
          %1423 = vrot.lane.b32.xlu0 %v1378, 123
          %v1424 = vpop.permute.xlu0 %1423
          %s1425 = sld [smem:[#allocation5 + $0x52]]
          %v1426 = vstv %s1425
          %v1427 = vmul.f32 %v1426, %v1422
          %v1428 = vmul.f32 %v1426, %v1424
          %v1429 = vadd.f32 %v1419, %v1427
          %v1430 = vadd.f32 %v1420, %v1428
          %1431 = vrot.lane.b32.xlu0 %v1376, 122
          %v1432 = vpop.permute.xlu0 %1431
          %1433 = vrot.lane.b32.xlu0 %v1378, 122
          %v1434 = vpop.permute.xlu0 %1433
          %s1435 = sld [smem:[#allocation5 + $0x53]]
          %v1436 = vstv %s1435
          %v1437 = vmul.f32 %v1436, %v1432
          %v1438 = vmul.f32 %v1436, %v1434
          %v1439 = vadd.f32 %v1429, %v1437
          %v1440 = vadd.f32 %v1430, %v1438
          %s1441 = sld [smem:[#allocation5 + $0x54]]
          %v1442 = vstv %s1441
          %v1443 = vmul.f32 %v1442, %v1033
          %v1444 = vmul.f32 %v1442, %v1034
          %v1445 = vmul.f32 %v1442, %v1035
          %v1449 = vrot.slane %v1443, 5
          %v1450 = vrot.slane %v1444, 5
          %v1451 = vsel %vm233, %v1449, %v1450
          %v1452 = vrot.slane %v1445, 5
          %v1453 = vsel %vm233, %v1450, %v1452
          %v1456 = vadd.f32 %v1439, %v1451
          %v1457 = vadd.f32 %v1440, %v1453
          %v1458 = vrot.slane %v1033, 5
          %v1459 = vrot.slane %v1034, 5
          %v1460 = vsel %vm233, %v1458, %v1459
          %v1461 = vrot.slane %v1035, 5
          %v1462 = vsel %vm233, %v1459, %v1461
          %1465 = vrot.lane.b32.xlu0 %v1460, 127
          %v1466 = vpop.permute.xlu0 %1465
          %1467 = vrot.lane.b32.xlu0 %v1462, 127
          %v1468 = vpop.permute.xlu0 %1467
          %s1469 = sld [smem:[#allocation5 + $0x55]]
          %v1470 = vstv %s1469
          %v1471 = vmul.f32 %v1470, %v1466
          %v1472 = vmul.f32 %v1470, %v1468
          %v1473 = vadd.f32 %v1456, %v1471
          %v1474 = vadd.f32 %v1457, %v1472
          %1475 = vrot.lane.b32.xlu0 %v1460, 126
          %v1476 = vpop.permute.xlu0 %1475
          %1477 = vrot.lane.b32.xlu0 %v1462, 126
          %v1478 = vpop.permute.xlu0 %1477
          %s1479 = sld [smem:[#allocation5 + $0x56]]
          %v1480 = vstv %s1479
          %v1481 = vmul.f32 %v1480, %v1476
          %v1482 = vmul.f32 %v1480, %v1478
          %v1483 = vadd.f32 %v1473, %v1481
          %v1484 = vadd.f32 %v1474, %v1482
          %1485 = vrot.lane.b32.xlu0 %v1460, 125
          %v1486 = vpop.permute.xlu0 %1485
          %1487 = vrot.lane.b32.xlu0 %v1462, 125
          %v1488 = vpop.permute.xlu0 %1487
          %s1489 = sld [smem:[#allocation5 + $0x57]]
          %v1490 = vstv %s1489
          %v1491 = vmul.f32 %v1490, %v1486
          %v1492 = vmul.f32 %v1490, %v1488
          %v1493 = vadd.f32 %v1483, %v1491
          %v1494 = vadd.f32 %v1484, %v1492
          %1495 = vrot.lane.b32.xlu0 %v1460, 124
          %v1496 = vpop.permute.xlu0 %1495
          %1497 = vrot.lane.b32.xlu0 %v1462, 124
          %v1498 = vpop.permute.xlu0 %1497
          %s1499 = sld [smem:[#allocation5 + $0x58]]
          %v1500 = vstv %s1499
          %v1501 = vmul.f32 %v1500, %v1496
          %v1502 = vmul.f32 %v1500, %v1498
          %v1503 = vadd.f32 %v1493, %v1501
          %v1504 = vadd.f32 %v1494, %v1502
          %1505 = vrot.lane.b32.xlu0 %v1460, 123
          %v1506 = vpop.permute.xlu0 %1505
          %1507 = vrot.lane.b32.xlu0 %v1462, 123
          %v1508 = vpop.permute.xlu0 %1507
          %s1509 = sld [smem:[#allocation5 + $0x59]]
          %v1510 = vstv %s1509
          %v1511 = vmul.f32 %v1510, %v1506
          %v1512 = vmul.f32 %v1510, %v1508
          %v1513 = vadd.f32 %v1503, %v1511
          %v1514 = vadd.f32 %v1504, %v1512
          %1515 = vrot.lane.b32.xlu0 %v1460, 122
          %v1516 = vpop.permute.xlu0 %1515
          %1517 = vrot.lane.b32.xlu0 %v1462, 122
          %v1518 = vpop.permute.xlu0 %1517
          %s1519 = sld [smem:[#allocation5 + $0x5a]]
          %v1520 = vstv %s1519
          %v1521 = vmul.f32 %v1520, %v1516
          %v1522 = vmul.f32 %v1520, %v1518
          %v1523 = vadd.f32 %v1513, %v1521
          %v1524 = vadd.f32 %v1514, %v1522
          %s1525 = sld [smem:[#allocation5 + $0x5b]]
          %v1526 = vstv %s1525
          %v1527 = vmul.f32 %v1526, %v1033
          %v1528 = vmul.f32 %v1526, %v1034
          %v1529 = vmul.f32 %v1526, %v1035
          %v1533 = vrot.slane %v1527, 6
          %v1534 = vrot.slane %v1528, 6
          %v1535 = vsel %vm247, %v1533, %v1534
          %v1536 = vrot.slane %v1529, 6
          %v1537 = vsel %vm247, %v1534, %v1536
          %v1540 = vadd.f32 %v1523, %v1535
          %v1541 = vadd.f32 %v1524, %v1537
          %v1542 = vrot.slane %v1033, 6
          %v1543 = vrot.slane %v1034, 6
          %v1544 = vsel %vm247, %v1542, %v1543
          %v1545 = vrot.slane %v1035, 6
          %v1546 = vsel %vm247, %v1543, %v1545
          %1549 = vrot.lane.b32.xlu0 %v1544, 127
          %v1550 = vpop.permute.xlu0 %1549
          %1551 = vrot.lane.b32.xlu0 %v1546, 127
          %v1552 = vpop.permute.xlu0 %1551
          %s1553 = sld [smem:[#allocation5 + $0x5c]]
          %v1554 = vstv %s1553
          %v1555 = vmul.f32 %v1554, %v1550
          %v1556 = vmul.f32 %v1554, %v1552
          %v1557 = vadd.f32 %v1540, %v1555
          %v1558 = vadd.f32 %v1541, %v1556
          %1559 = vrot.lane.b32.xlu0 %v1544, 126
          %v1560 = vpop.permute.xlu0 %1559
          %1561 = vrot.lane.b32.xlu0 %v1546, 126
          %v1562 = vpop.permute.xlu0 %1561
          %s1563 = sld [smem:[#allocation5 + $0x5d]]
          %v1564 = vstv %s1563
          %v1565 = vmul.f32 %v1564, %v1560
          %v1566 = vmul.f32 %v1564, %v1562
          %v1567 = vadd.f32 %v1557, %v1565
          %v1568 = vadd.f32 %v1558, %v1566
          %1569 = vrot.lane.b32.xlu0 %v1544, 125
          %v1570 = vpop.permute.xlu0 %1569
          %1571 = vrot.lane.b32.xlu0 %v1546, 125
          %v1572 = vpop.permute.xlu0 %1571
          %s1573 = sld [smem:[#allocation5 + $0x5e]]
          %v1574 = vstv %s1573
          %v1575 = vmul.f32 %v1574, %v1570
          %v1576 = vmul.f32 %v1574, %v1572
          %v1577 = vadd.f32 %v1567, %v1575
          %v1578 = vadd.f32 %v1568, %v1576
          %1579 = vrot.lane.b32.xlu0 %v1544, 124
          %v1580 = vpop.permute.xlu0 %1579
          %1581 = vrot.lane.b32.xlu0 %v1546, 124
          %v1582 = vpop.permute.xlu0 %1581
          %s1583 = sld [smem:[#allocation5 + $0x5f]]
          %v1584 = vstv %s1583
          %v1585 = vmul.f32 %v1584, %v1580
          %v1586 = vmul.f32 %v1584, %v1582
          %v1587 = vadd.f32 %v1577, %v1585
          %v1588 = vadd.f32 %v1578, %v1586
          %1589 = vrot.lane.b32.xlu0 %v1544, 123
          %v1590 = vpop.permute.xlu0 %1589
          %1591 = vrot.lane.b32.xlu0 %v1546, 123
          %v1592 = vpop.permute.xlu0 %1591
          %s1593 = sld [smem:[#allocation5 + $0x60]]
          %v1594 = vstv %s1593
          %v1595 = vmul.f32 %v1594, %v1590
          %v1596 = vmul.f32 %v1594, %v1592
          %v1597 = vadd.f32 %v1587, %v1595
          %v1598 = vadd.f32 %v1588, %v1596
          %1599 = vrot.lane.b32.xlu0 %v1544, 122
          %v1600 = vpop.permute.xlu0 %1599
          %1601 = vrot.lane.b32.xlu0 %v1546, 122
          %v1602 = vpop.permute.xlu0 %1601
          %s1603 = sld [smem:[#allocation5 + $0x61]]
          %v1604 = vstv %s1603
          %v1605 = vmul.f32 %v1604, %v1600
          %v1606 = vmul.f32 %v1604, %v1602
          %v1607 = vadd.f32 %v1597, %v1605
          %v1608 = vadd.f32 %v1598, %v1606
          %s1609 = sld [smem:[#allocation6]]
          %v1610 = vstv %s1609
          %v1611 = vadd.f32 %v1607, %v1610
          %v1612 = vadd.f32 %v1608, %v1610
          %1613 = vst.msk [vmem:[%s160] sm:$0xff] %vm181, %v1611
          %1614 = vst.msk [vmem:[%s160 + $0x8] sm:$0xff] %vm181, %v1612
        $region36: #{tpu_custom_call.1} parent=23 // pred_fallthru
          _
        %s1615 = sand.u32 %s75, 1
        %s1616 = scalar_lea.sflag [#allocation9], %s1615
        %s1617 = sand.u32 %s75, 1
        %s1618 = smul.addr %s1617, 16
        %s1619 = scalar_lea.vmem [#allocation10], %s1618
        // Predicated region
        $region37: #{tpu_custom_call.1} parent=23 // pred_check
          %p1620 = pneg %p85
        $region38: #{tpu_custom_call.1} parent=23 // pred_check_branch
          %1622 = sbr.rel (%p1620) target = $region40
        $region39: #{tpu_custom_call.1} parent=23 // pred_region
          %s1624 = ssub.s32 256, 256
          %1625 = vsyncadd %s1616, %s1624
          %s1626 = smul.addr %s31, 2
          %s1627 = smul.addr %s1626, 128
          %s1628 = scalar_lea.hbm %s3, %s1627
          %s1629 = sshll.u32 %s1619, 4
          %s1630 = int_to_ptr.vmem [resolvable:$true] %s1629
          %1635 = dma.vmem_to_hbm [thread:$0]  %s1630, 256, %s1628, %s1616, 128, 128, 8
        $region40: #{tpu_custom_call.1} parent=23 // pred_fallthru
          _
      $region24: #{tpu_custom_call.1} parent=5 // pred_fallthru
        _
      %p1636 = scmp.le.s32.totalorder 2, %s22
      // Predicated region
      $region41: #{tpu_custom_call.1} parent=5 // pred_check
        %p1637 = pneg %p1636
      $region42: #{tpu_custom_call.1} parent=5 // pred_check_branch
        %1639 = sbr.rel (%p1637) target = $region44
      $region43: #{tpu_custom_call.1} parent=5 // pred_region
        %s1640 = ssub.s32 %s22, 2
        // Predicated region
        $region45: #{tpu_custom_call.1} parent=43 // pred_check
          %p1641 = pneg %p91
        $region46: #{tpu_custom_call.1} parent=43 // pred_check_branch
          %1643 = sbr.rel (%p1641) target = $region48
        $region47: #{tpu_custom_call.1} parent=43 // pred_region
          %s1644 = sand.u32 %s76, 1
          %s1645 = scalar_lea.sflag [#allocation9], %s1644
          %s1646 = sand.u32 %s76, 1
          %s1647 = smul.addr %s1646, 16
          %s1648 = scalar_lea.vmem [#allocation10], %s1647
          %1649 = dma.done %s1645, 256
        $region48: #{tpu_custom_call.1} parent=43 // pred_fallthru
          _
      $region44: #{tpu_custom_call.1} parent=5 // pred_fallthru
        _
    $region6: #{tpu_custom_call.1} parent=1 // loop_footer
      %s26 = sadd.s32 1, %s22
    $region7: #{tpu_custom_call.1} parent=1 // loop_footer_branch
      %21 = sbr.rel target = $region3
    $region8: #{tpu_custom_call.1} parent=1 // loop_exit
      _
    %1650 = vsyncpa [#allocation8], 1
    %s1651 = scalar_lea.sflag [#allocation8], 1
    %1652 = vsyncpa %s1651, 1
    %1653 = vsyncpa [#allocation9], 1
    %s1654 = scalar_lea.sflag [#allocation9], 1
    %1655 = vsyncpa %s1654, 1

</llo_original>
